<compile_context>
chip_gen: v7x
topology: tpu7x:2x2x1
jax: 0.10.0
libtpu: 0.0.40
codegen_flags: <defaults>
</compile_context>

<pallas_src>
import functools
import jax
import jax.numpy as jnp
from jax.experimental import pallas as pl
from jax.experimental.pallas import tpu as pltpu


# ---------------------------------------------------------------------------
# Fused Pallas kernel: entire VAE.forward in one call
# ---------------------------------------------------------------------------
def _vae_fused_kernel(
    # data
    x_ref, dy_ref, eps_ref,
    # packed weights / biases
    w_enc_h, b_enc_h,          # (L, 2H), (1, 2H)      [W_qzd_h | W_qzy_h]
    w_enc_loc, b_enc_loc,      # (2H, zt), (1, zt)     blockdiag(W_qzd_loc, W_qzy_loc)
    w_enc_scale, b_enc_scale,  # (2H, zt), (1, zt)     blockdiag(W_qzd_scale, W_qzy_scale)
    w_px_h, b_px_h,            # (zt, H), (1, H)
    w_px_out, b_px_out,        # (H, L), (1, L)
    w_p_h, b_p_h,              # (d+y, zt), (1, zt)    blockdiag(W_pzd_h, W_pzy_h)
    w_p_loc, b_p_loc,          # (zt, zt), (1, zt)     blockdiag
    w_p_scale, b_p_scale,      # (zt, zt), (1, zt)     blockdiag
    w_cls, b_cls,              # (zt, d+y), (1, d+y)   blockdiag(W_qd, W_qy)
    # outputs (all lane-packed along the latent axis: [zd | zy], [d_hat | y_hat])
    x_recon_ref, q_loc_ref, q_scale_ref, z_q_ref, p_loc_ref, p_scale_ref, cls_ref,
):
    f32 = jnp.float32
    x = x_ref[...]                                    # (B, L)

    # --- shared encoder trunk: both q(zd|x) and q(zy|x) hidden layers -------
    h_enc = jnp.maximum(
        jnp.dot(x, w_enc_h[...], preferred_element_type=f32) + b_enc_h[...],
        0.0)                                          # (B, 2H) = [h_zd | h_zy]

    # --- fused loc / scale heads (block-diagonal over the zd/zy branches) ---
    q_loc = jnp.dot(h_enc, w_enc_loc[...], preferred_element_type=f32) + b_enc_loc[...]
    q_scale = jax.nn.softplus(
        jnp.dot(h_enc, w_enc_scale[...], preferred_element_type=f32) + b_enc_scale[...]
    ) + 1e-3                                          # strictly positive scale

    # --- fused reparameterization: z = loc + scale * eps  (Normal.rsample) --
    z_q = q_loc + q_scale * eps_ref[...]              # (B, zt) = [zd_q | zy_q]

    # --- p(x | zy, zd): z_q already equals concat([zd_q, zy_q]) -------------
    h_px = jnp.maximum(
        jnp.dot(z_q, w_px_h[...], preferred_element_type=f32) + b_px_h[...],
        0.0)
    x_recon = jnp.dot(h_px, w_px_out[...], preferred_element_type=f32) + b_px_out[...]

    # --- p(zd | d) and p(zy | y), fused via block-diagonal weights ----------
    dy = dy_ref[...]                                  # (B, d_dim + y_dim) = [d | y]
    h_p = jnp.maximum(
        jnp.dot(dy, w_p_h[...], preferred_element_type=f32) + b_p_h[...],
        0.0)                                          # (B, zt) = [h_pzd | h_pzy]
    p_loc = jnp.dot(h_p, w_p_loc[...], preferred_element_type=f32) + b_p_loc[...]
    p_scale = jax.nn.softplus(
        jnp.dot(h_p, w_p_scale[...], preferred_element_type=f32) + b_p_scale[...]
    ) + 1e-3

    # --- aux classifiers, fused: z_q @ blockdiag(W_qd, W_qy) ----------------
    cls = jnp.dot(z_q, w_cls[...], preferred_element_type=f32) + b_cls[...]

    # --- single full-ref (lane-packed) stores --------------------------------
    x_recon_ref[...] = x_recon
    q_loc_ref[...] = q_loc
    q_scale_ref[...] = q_scale
    z_q_ref[...] = z_q
    p_loc_ref[...] = p_loc
    p_scale_ref[...] = p_scale
    cls_ref[...] = cls


# ---------------------------------------------------------------------------
# Parameter construction (deterministic) + packing for the fused kernel
# ---------------------------------------------------------------------------
def _init_linear(key, in_dim, out_dim, scale=0.05):
    kw, kb = jax.random.split(key)
    w = scale * jax.random.normal(kw, (in_dim, out_dim), jnp.float32)
    b = scale * jax.random.normal(kb, (out_dim,), jnp.float32)
    return w, b


def _block_diag(a, b):
    m1, n1 = a.shape
    m2, n2 = b.shape
    out = jnp.zeros((m1 + m2, n1 + n2), a.dtype)
    out = out.at[:m1, :n1].set(a)
    out = out.at[m1:, n1:].set(b)
    return out


def make_vae_params(key, *, L, H, zd_dim, zy_dim, y_dim, d_dim):
    keys = jax.random.split(key, 16)
    # raw per-module weights (same contract as the PyTorch sub-modules)
    qzd_h = _init_linear(keys[0], L, H)
    qzd_loc = _init_linear(keys[1], H, zd_dim)
    qzd_scale = _init_linear(keys[2], H, zd_dim)
    qzy_h = _init_linear(keys[3], L, H)
    qzy_loc = _init_linear(keys[4], H, zy_dim)
    qzy_scale = _init_linear(keys[5], H, zy_dim)
    px_h = _init_linear(keys[6], zd_dim + zy_dim, H)       # consumes [zd | zy]
    px_out = _init_linear(keys[7], H, L)
    pzd_h = _init_linear(keys[8], d_dim, zd_dim)
    pzd_loc = _init_linear(keys[9], zd_dim, zd_dim)
    pzd_scale = _init_linear(keys[10], zd_dim, zd_dim)
    pzy_h = _init_linear(keys[11], y_dim, zy_dim)
    pzy_loc = _init_linear(keys[12], zy_dim, zy_dim)
    pzy_scale = _init_linear(keys[13], zy_dim, zy_dim)
    qd = _init_linear(keys[14], zd_dim, d_dim)
    qy = _init_linear(keys[15], zy_dim, y_dim)

    cat1 = lambda a, b: jnp.concatenate([a, b], axis=1)
    cat0 = lambda a, b: jnp.concatenate([a, b], axis=0)

    # One-time packing (off the hot path): shared-trunk concat + block-diagonal
    # head fusion.  Mathematically identical to running the branches separately.
    return {
        "enc_h": (cat1(qzd_h[0], qzy_h[0]), cat0(qzd_h[1], qzy_h[1])),
        "enc_loc": (_block_diag(qzd_loc[0], qzy_loc[0]), cat0(qzd_loc[1], qzy_loc[1])),
        "enc_scale": (_block_diag(qzd_scale[0], qzy_scale[0]), cat0(qzd_scale[1], qzy_scale[1])),
        "px_h": px_h,
        "px_out": px_out,
        "p_h": (_block_diag(pzd_h[0], pzy_h[0]), cat0(pzd_h[1], pzy_h[1])),
        "p_loc": (_block_diag(pzd_loc[0], pzy_loc[0]), cat0(pzd_loc[1], pzy_loc[1])),
        "p_scale": (_block_diag(pzd_scale[0], pzy_scale[0]), cat0(pzd_scale[1], pzy_scale[1])),
        "cls": (_block_diag(qd[0], qy[0]), cat0(qd[1], qy[1])),
    }


# ---------------------------------------------------------------------------
# VAE.forward (y is not None branch) — single fused pallas_call + cheap slices
# ---------------------------------------------------------------------------
@functools.partial(jax.jit, static_argnames=("zd_dim", "zy_dim"))
def vae_forward(params, x, y, d, rng, *, zd_dim, zy_dim):
    """Returns (x_recon, d_hat, y_hat, qzd, pzd, zd_q, qzy, pzy, zy_q, zy_q_loc);
    Normal distributions are represented as (loc, scale) tuples."""
    B = x.shape[0]
    L = x.shape[1] * x.shape[2]
    d_dim = d.shape[1]
    y_dim = y.shape[1]
    zt = zd_dim + zy_dim
    cls_dim = d_dim + y_dim

    x_flat = x.reshape(B, L).astype(jnp.float32)          # (B, 1, L) -> (B, L)
    dy = jnp.concatenate([d, y], axis=-1).astype(jnp.float32)  # kernel inputs only
    eps = jax.random.normal(rng, (B, zt), jnp.float32)     # [eps_zd | eps_zy]

    row = lambda b: b.reshape(1, -1)
    inputs = [
        x_flat, dy, eps,
        params["enc_h"][0], row(params["enc_h"][1]),
        params["enc_loc"][0], row(params["enc_loc"][1]),
        params["enc_scale"][0], row(params["enc_scale"][1]),
        params["px_h"][0], row(params["px_h"][1]),
        params["px_out"][0], row(params["px_out"][1]),
        params["p_h"][0], row(params["p_h"][1]),
        params["p_loc"][0], row(params["p_loc"][1]),
        params["p_scale"][0], row(params["p_scale"][1]),
        params["cls"][0], row(params["cls"][1]),
    ]

    def full_spec(shape):
        return pl.BlockSpec(shape, lambda i: (0,) * len(shape))

    out_shape = (
        jax.ShapeDtypeStruct((B, L), jnp.float32),        # x_recon
        jax.ShapeDtypeStruct((B, zt), jnp.float32),       # [zd_q_loc   | zy_q_loc]
        jax.ShapeDtypeStruct((B, zt), jnp.float32),       # [zd_q_scale | zy_q_scale]
        jax.ShapeDtypeStruct((B, zt), jnp.float32),       # [zd_q       | zy_q]
        jax.ShapeDtypeStruct((B, zt), jnp.float32),       # [zd_p_loc   | zy_p_loc]
        jax.ShapeDtypeStruct((B, zt), jnp.float32),       # [zd_p_scale | zy_p_scale]
        jax.ShapeDtypeStruct((B, cls_dim), jnp.float32),  # [d_hat | y_hat]
    )

    outs = pl.pallas_call(
        _vae_fused_kernel,
        out_shape=out_shape,
        grid=(1,),
        in_specs=[full_spec(a.shape) for a in inputs],
        out_specs=tuple(full_spec(s.shape) for s in out_shape),
        compiler_params=pltpu.CompilerParams(dimension_semantics=("arbitrary",)),
    )(*inputs)

    x_recon, q_loc, q_scale, z_q, p_loc, p_scale, cls = outs

    zd_q_loc, zy_q_loc = q_loc[:, :zd_dim], q_loc[:, zd_dim:]
    zd_q_scale, zy_q_scale = q_scale[:, :zd_dim], q_scale[:, zd_dim:]
    zd_q, zy_q = z_q[:, :zd_dim], z_q[:, zd_dim:]
    zd_p_loc, zy_p_loc = p_loc[:, :zd_dim], p_loc[:, zd_dim:]
    zd_p_scale, zy_p_scale = p_scale[:, :zd_dim], p_scale[:, zd_dim:]
    d_hat, y_hat = cls[:, :d_dim], cls[:, d_dim:]

    qzd = (zd_q_loc, zd_q_scale)
    pzd = (zd_p_loc, zd_p_scale)
    qzy = (zy_q_loc, zy_q_scale)
    pzy = (zy_p_loc, zy_p_scale)
    return (x_recon.reshape(B, 1, L), d_hat, y_hat,
            qzd, pzd, zd_q, qzy, pzy, zy_q, zy_q_loc)


# ---------------------------------------------------------------------------
# Main
# ---------------------------------------------------------------------------
if __name__ == "__main__":
    # Small shapes consistent with the module's forward (x is (B, 1, L)).
    B, L, H = 4, 128, 64
    zd_dim, zy_dim = 16, 16
    y_dim, d_dim = 5, 3

    root = jax.random.PRNGKey(0)
    k_params, k_x, k_y, k_d, k_sample = jax.random.split(root, 5)

    params = make_vae_params(
        k_params, L=L, H=H, zd_dim=zd_dim, zy_dim=zy_dim, y_dim=y_dim, d_dim=d_dim
    )

    x = jax.random.normal(k_x, (B, 1, L), jnp.float32)
    y_idx = jax.random.randint(k_y, (B,), 0, y_dim)
    d_idx = jax.random.randint(k_d, (B,), 0, d_dim)
    y = jax.nn.one_hot(y_idx, y_dim, dtype=jnp.float32)  # F.one_hot(...).float()
    d = jax.nn.one_hot(d_idx, d_dim, dtype=jnp.float32)

    outs = vae_forward(params, x, y, d, k_sample, zd_dim=zd_dim, zy_dim=zy_dim)
    outs = jax.block_until_ready(outs)

    x_recon = outs[0]
    assert x_recon.shape == (B, 1, L)
    assert outs[1].shape == (B, d_dim)   # d_hat
    assert outs[2].shape == (B, y_dim)   # y_hat
    assert outs[3][0].shape == (B, zd_dim) and outs[3][1].shape == (B, zd_dim)  # qzd
    assert outs[4][0].shape == (B, zd_dim)                                      # pzd
    assert outs[5].shape == (B, zd_dim)  # zd_q
    assert outs[6][0].shape == (B, zy_dim)                                      # qzy
    assert outs[7][0].shape == (B, zy_dim)                                      # pzy
    assert outs[8].shape == (B, zy_dim)  # zy_q
    assert outs[9].shape == (B, zy_dim)  # zy_q_loc (features)
    assert bool(jnp.all(outs[3][1] > 0.0)) and bool(jnp.all(outs[4][1] > 0.0))  # scales > 0

    print("KERNEL_OK")
</pallas_src>

<mosaic_0001>
module attributes {stable_mosaic.version = 11 : i64} {
  func.func @_vae_fused_kernel(%arg0: i32, %arg1: memref<4x128xf32, #tpu.memory_space<vmem>>, %arg2: memref<4x8xf32, #tpu.memory_space<vmem>>, %arg3: memref<4x32xf32, #tpu.memory_space<vmem>>, %arg4: memref<128x128xf32, #tpu.memory_space<vmem>>, %arg5: memref<1x128xf32, #tpu.memory_space<vmem>>, %arg6: memref<128x32xf32, #tpu.memory_space<vmem>>, %arg7: memref<1x32xf32, #tpu.memory_space<vmem>>, %arg8: memref<128x32xf32, #tpu.memory_space<vmem>>, %arg9: memref<1x32xf32, #tpu.memory_space<vmem>>, %arg10: memref<32x64xf32, #tpu.memory_space<vmem>>, %arg11: memref<1x64xf32, #tpu.memory_space<vmem>>, %arg12: memref<64x128xf32, #tpu.memory_space<vmem>>, %arg13: memref<1x128xf32, #tpu.memory_space<vmem>>, %arg14: memref<8x32xf32, #tpu.memory_space<vmem>>, %arg15: memref<1x32xf32, #tpu.memory_space<vmem>>, %arg16: memref<32x32xf32, #tpu.memory_space<vmem>>, %arg17: memref<1x32xf32, #tpu.memory_space<vmem>>, %arg18: memref<32x32xf32, #tpu.memory_space<vmem>>, %arg19: memref<1x32xf32, #tpu.memory_space<vmem>>, %arg20: memref<32x8xf32, #tpu.memory_space<vmem>>, %arg21: memref<1x8xf32, #tpu.memory_space<vmem>>, %arg22: memref<4x128xf32, #tpu.memory_space<vmem>>, %arg23: memref<4x32xf32, #tpu.memory_space<vmem>>, %arg24: memref<4x32xf32, #tpu.memory_space<vmem>>, %arg25: memref<4x32xf32, #tpu.memory_space<vmem>>, %arg26: memref<4x32xf32, #tpu.memory_space<vmem>>, %arg27: memref<4x32xf32, #tpu.memory_space<vmem>>, %arg28: memref<4x8xf32, #tpu.memory_space<vmem>>) attributes {dimension_semantics = [#tpu.dimension_semantics<arbitrary>], iteration_bounds = array<i64: 1>, scalar_prefetch = 0 : i64, scratch_operands = 0 : i64, tpu.core_type = #tpu.core_type<tc>, window_params = [{pipeline_mode = #tpu.pipeline_mode<synchronous>, transform_indices = @transform_0, window_bounds = array<i64: 4, 128>}, {pipeline_mode = #tpu.pipeline_mode<synchronous>, transform_indices = @transform_1, window_bounds = array<i64: 4, 8>}, {pipeline_mode = #tpu.pipeline_mode<synchronous>, transform_indices = @transform_2, window_bounds = array<i64: 4, 32>}, {pipeline_mode = #tpu.pipeline_mode<synchronous>, transform_indices = @transform_3, window_bounds = array<i64: 128, 128>}, {pipeline_mode = #tpu.pipeline_mode<synchronous>, transform_indices = @transform_4, window_bounds = array<i64: 1, 128>}, {pipeline_mode = #tpu.pipeline_mode<synchronous>, transform_indices = @transform_5, window_bounds = array<i64: 128, 32>}, {pipeline_mode = #tpu.pipeline_mode<synchronous>, transform_indices = @transform_6, window_bounds = array<i64: 1, 32>}, {pipeline_mode = #tpu.pipeline_mode<synchronous>, transform_indices = @transform_7, window_bounds = array<i64: 128, 32>}, {pipeline_mode = #tpu.pipeline_mode<synchronous>, transform_indices = @transform_8, window_bounds = array<i64: 1, 32>}, {pipeline_mode = #tpu.pipeline_mode<synchronous>, transform_indices = @transform_9, window_bounds = array<i64: 32, 64>}, {pipeline_mode = #tpu.pipeline_mode<synchronous>, transform_indices = @transform_10, window_bounds = array<i64: 1, 64>}, {pipeline_mode = #tpu.pipeline_mode<synchronous>, transform_indices = @transform_11, window_bounds = array<i64: 64, 128>}, {pipeline_mode = #tpu.pipeline_mode<synchronous>, transform_indices = @transform_12, window_bounds = array<i64: 1, 128>}, {pipeline_mode = #tpu.pipeline_mode<synchronous>, transform_indices = @transform_13, window_bounds = array<i64: 8, 32>}, {pipeline_mode = #tpu.pipeline_mode<synchronous>, transform_indices = @transform_14, window_bounds = array<i64: 1, 32>}, {pipeline_mode = #tpu.pipeline_mode<synchronous>, transform_indices = @transform_15, window_bounds = array<i64: 32, 32>}, {pipeline_mode = #tpu.pipeline_mode<synchronous>, transform_indices = @transform_16, window_bounds = array<i64: 1, 32>}, {pipeline_mode = #tpu.pipeline_mode<synchronous>, transform_indices = @transform_17, window_bounds = array<i64: 32, 32>}, {pipeline_mode = #tpu.pipeline_mode<synchronous>, transform_indices = @transform_18, window_bounds = array<i64: 1, 32>}, {pipeline_mode = #tpu.pipeline_mode<synchronous>, transform_indices = @transform_19, window_bounds = array<i64: 32, 8>}, {pipeline_mode = #tpu.pipeline_mode<synchronous>, transform_indices = @transform_20, window_bounds = array<i64: 1, 8>}, {pipeline_mode = #tpu.pipeline_mode<synchronous>, transform_indices = @transform_21, window_bounds = array<i64: 4, 128>}, {pipeline_mode = #tpu.pipeline_mode<synchronous>, transform_indices = @transform_22, window_bounds = array<i64: 4, 32>}, {pipeline_mode = #tpu.pipeline_mode<synchronous>, transform_indices = @transform_23, window_bounds = array<i64: 4, 32>}, {pipeline_mode = #tpu.pipeline_mode<synchronous>, transform_indices = @transform_24, window_bounds = array<i64: 4, 32>}, {pipeline_mode = #tpu.pipeline_mode<synchronous>, transform_indices = @transform_25, window_bounds = array<i64: 4, 32>}, {pipeline_mode = #tpu.pipeline_mode<synchronous>, transform_indices = @transform_26, window_bounds = array<i64: 4, 32>}, {pipeline_mode = #tpu.pipeline_mode<synchronous>, transform_indices = @transform_27, window_bounds = array<i64: 4, 8>}]} {
    %c0 = arith.constant 0 : index
    %c0_0 = arith.constant 0 : index
    %0 = vector.load %arg1[%c0, %c0_0] : memref<4x128xf32, #tpu.memory_space<vmem>>, vector<4x128xf32>
    %c0_1 = arith.constant 0 : index
    %c0_2 = arith.constant 0 : index
    %1 = vector.load %arg4[%c0_1, %c0_2] : memref<128x128xf32, #tpu.memory_space<vmem>>, vector<128x128xf32>
    %cst = arith.constant dense<0.000000e+00> : vector<4x128xf32>
    %2 = tpu.matmul %0, %1, %cst {dimension_numbers = #tpu.dot_dimension_numbers<[1], [0], [0], [1], [0, 0, 1, 1], [], []>} : vector<4x128xf32>, vector<128x128xf32>, vector<4x128xf32> -> vector<4x128xf32>
    %c0_3 = arith.constant 0 : index
    %c0_4 = arith.constant 0 : index
    %3 = vector.load %arg5[%c0_3, %c0_4] : memref<1x128xf32, #tpu.memory_space<vmem>>, vector<1x128xf32>
    %4 = vector.broadcast %3 : vector<1x128xf32> to vector<4x128xf32>
    %5 = arith.addf %2, %4 : vector<4x128xf32>
    %cst_5 = arith.constant 0.000000e+00 : f32
    %6 = vector.broadcast %cst_5 : f32 to vector<4x128xf32>
    %7 = arith.maximumf %5, %6 : vector<4x128xf32>
    %c0_6 = arith.constant 0 : index
    %c0_7 = arith.constant 0 : index
    %8 = vector.load %arg6[%c0_6, %c0_7] : memref<128x32xf32, #tpu.memory_space<vmem>>, vector<128x32xf32>
    %cst_8 = arith.constant dense<0.000000e+00> : vector<4x32xf32>
    %9 = tpu.matmul %7, %8, %cst_8 {dimension_numbers = #tpu.dot_dimension_numbers<[1], [0], [0], [1], [0, 0, 1, 1], [], []>} : vector<4x128xf32>, vector<128x32xf32>, vector<4x32xf32> -> vector<4x32xf32>
    %c0_9 = arith.constant 0 : index
    %c0_10 = arith.constant 0 : index
    %10 = vector.load %arg7[%c0_9, %c0_10] : memref<1x32xf32, #tpu.memory_space<vmem>>, vector<1x32xf32>
    %11 = vector.broadcast %10 : vector<1x32xf32> to vector<4x32xf32>
    %12 = arith.addf %9, %11 : vector<4x32xf32>
    %c0_11 = arith.constant 0 : index
    %c0_12 = arith.constant 0 : index
    %13 = vector.load %arg8[%c0_11, %c0_12] : memref<128x32xf32, #tpu.memory_space<vmem>>, vector<128x32xf32>
    %cst_13 = arith.constant dense<0.000000e+00> : vector<4x32xf32>
    %14 = tpu.matmul %7, %13, %cst_13 {dimension_numbers = #tpu.dot_dimension_numbers<[1], [0], [0], [1], [0, 0, 1, 1], [], []>} : vector<4x128xf32>, vector<128x32xf32>, vector<4x32xf32> -> vector<4x32xf32>
    %c0_14 = arith.constant 0 : index
    %c0_15 = arith.constant 0 : index
    %15 = vector.load %arg9[%c0_14, %c0_15] : memref<1x32xf32, #tpu.memory_space<vmem>>, vector<1x32xf32>
    %16 = vector.broadcast %15 : vector<1x32xf32> to vector<4x32xf32>
    %17 = arith.addf %14, %16 : vector<4x32xf32>
    %cst_16 = arith.constant 0.000000e+00 : f32
    %18 = vector.broadcast %cst_16 : f32 to vector<4x32xf32>
    %19 = arith.maximumf %17, %18 : vector<4x32xf32>
    %20 = vector.broadcast %cst_16 : f32 to vector<4x32xf32>
    %21 = arith.subf %17, %20 : vector<4x32xf32>
    %22 = arith.cmpf one, %21, %21 : vector<4x32xf32>
    %23 = vector.broadcast %cst_16 : f32 to vector<4x32xf32>
    %24 = arith.addf %17, %23 : vector<4x32xf32>
    %25 = math.absf %21 : vector<4x32xf32>
    %cst_17 = arith.constant 0.000000e+00 : f32
    %26 = vector.broadcast %cst_17 : f32 to vector<4x32xf32>
    %27 = arith.subf %26, %25 : vector<4x32xf32>
    %28 = math.exp %27 : vector<4x32xf32>
    %29 = math.log1p %28 : vector<4x32xf32>
    %30 = arith.addf %19, %29 : vector<4x32xf32>
    %31 = arith.select %22, %24, %30 : vector<4x32xi1>, vector<4x32xf32>
    %cst_18 = arith.constant 1.000000e-03 : f32
    %32 = vector.broadcast %cst_18 : f32 to vector<4x32xf32>
    %33 = arith.addf %31, %32 : vector<4x32xf32>
    %c0_19 = arith.constant 0 : index
    %c0_20 = arith.constant 0 : index
    %34 = vector.load %arg3[%c0_19, %c0_20] : memref<4x32xf32, #tpu.memory_space<vmem>>, vector<4x32xf32>
    %35 = arith.mulf %33, %34 : vector<4x32xf32>
    %36 = arith.addf %12, %35 : vector<4x32xf32>
    %c0_21 = arith.constant 0 : index
    %c0_22 = arith.constant 0 : index
    %37 = vector.load %arg10[%c0_21, %c0_22] : memref<32x64xf32, #tpu.memory_space<vmem>>, vector<32x64xf32>
    %cst_23 = arith.constant dense<0.000000e+00> : vector<4x64xf32>
    %38 = tpu.matmul %36, %37, %cst_23 {dimension_numbers = #tpu.dot_dimension_numbers<[1], [0], [0], [1], [0, 0, 1, 1], [], []>} : vector<4x32xf32>, vector<32x64xf32>, vector<4x64xf32> -> vector<4x64xf32>
    %c0_24 = arith.constant 0 : index
    %c0_25 = arith.constant 0 : index
    %39 = vector.load %arg11[%c0_24, %c0_25] : memref<1x64xf32, #tpu.memory_space<vmem>>, vector<1x64xf32>
    %40 = vector.broadcast %39 : vector<1x64xf32> to vector<4x64xf32>
    %41 = arith.addf %38, %40 : vector<4x64xf32>
    %cst_26 = arith.constant 0.000000e+00 : f32
    %42 = vector.broadcast %cst_26 : f32 to vector<4x64xf32>
    %43 = arith.maximumf %41, %42 : vector<4x64xf32>
    %c0_27 = arith.constant 0 : index
    %c0_28 = arith.constant 0 : index
    %44 = vector.load %arg12[%c0_27, %c0_28] : memref<64x128xf32, #tpu.memory_space<vmem>>, vector<64x128xf32>
    %cst_29 = arith.constant dense<0.000000e+00> : vector<4x128xf32>
    %45 = tpu.matmul %43, %44, %cst_29 {dimension_numbers = #tpu.dot_dimension_numbers<[1], [0], [0], [1], [0, 0, 1, 1], [], []>} : vector<4x64xf32>, vector<64x128xf32>, vector<4x128xf32> -> vector<4x128xf32>
    %c0_30 = arith.constant 0 : index
    %c0_31 = arith.constant 0 : index
    %46 = vector.load %arg13[%c0_30, %c0_31] : memref<1x128xf32, #tpu.memory_space<vmem>>, vector<1x128xf32>
    %47 = vector.broadcast %46 : vector<1x128xf32> to vector<4x128xf32>
    %48 = arith.addf %45, %47 : vector<4x128xf32>
    %c0_32 = arith.constant 0 : index
    %c0_33 = arith.constant 0 : index
    %49 = vector.load %arg2[%c0_32, %c0_33] : memref<4x8xf32, #tpu.memory_space<vmem>>, vector<4x8xf32>
    %c0_34 = arith.constant 0 : index
    %c0_35 = arith.constant 0 : index
    %50 = vector.load %arg14[%c0_34, %c0_35] : memref<8x32xf32, #tpu.memory_space<vmem>>, vector<8x32xf32>
    %cst_36 = arith.constant dense<0.000000e+00> : vector<4x32xf32>
    %51 = tpu.matmul %49, %50, %cst_36 {dimension_numbers = #tpu.dot_dimension_numbers<[1], [0], [0], [1], [0, 0, 1, 1], [], []>} : vector<4x8xf32>, vector<8x32xf32>, vector<4x32xf32> -> vector<4x32xf32>
    %c0_37 = arith.constant 0 : index
    %c0_38 = arith.constant 0 : index
    %52 = vector.load %arg15[%c0_37, %c0_38] : memref<1x32xf32, #tpu.memory_space<vmem>>, vector<1x32xf32>
    %53 = vector.broadcast %52 : vector<1x32xf32> to vector<4x32xf32>
    %54 = arith.addf %51, %53 : vector<4x32xf32>
    %cst_39 = arith.constant 0.000000e+00 : f32
    %55 = vector.broadcast %cst_39 : f32 to vector<4x32xf32>
    %56 = arith.maximumf %54, %55 : vector<4x32xf32>
    %c0_40 = arith.constant 0 : index
    %c0_41 = arith.constant 0 : index
    %57 = vector.load %arg16[%c0_40, %c0_41] : memref<32x32xf32, #tpu.memory_space<vmem>>, vector<32x32xf32>
    %cst_42 = arith.constant dense<0.000000e+00> : vector<4x32xf32>
    %58 = tpu.matmul %56, %57, %cst_42 {dimension_numbers = #tpu.dot_dimension_numbers<[1], [0], [0], [1], [0, 0, 1, 1], [], []>} : vector<4x32xf32>, vector<32x32xf32>, vector<4x32xf32> -> vector<4x32xf32>
    %c0_43 = arith.constant 0 : index
    %c0_44 = arith.constant 0 : index
    %59 = vector.load %arg17[%c0_43, %c0_44] : memref<1x32xf32, #tpu.memory_space<vmem>>, vector<1x32xf32>
    %60 = vector.broadcast %59 : vector<1x32xf32> to vector<4x32xf32>
    %61 = arith.addf %58, %60 : vector<4x32xf32>
    %c0_45 = arith.constant 0 : index
    %c0_46 = arith.constant 0 : index
    %62 = vector.load %arg18[%c0_45, %c0_46] : memref<32x32xf32, #tpu.memory_space<vmem>>, vector<32x32xf32>
    %cst_47 = arith.constant dense<0.000000e+00> : vector<4x32xf32>
    %63 = tpu.matmul %56, %62, %cst_47 {dimension_numbers = #tpu.dot_dimension_numbers<[1], [0], [0], [1], [0, 0, 1, 1], [], []>} : vector<4x32xf32>, vector<32x32xf32>, vector<4x32xf32> -> vector<4x32xf32>
    %c0_48 = arith.constant 0 : index
    %c0_49 = arith.constant 0 : index
    %64 = vector.load %arg19[%c0_48, %c0_49] : memref<1x32xf32, #tpu.memory_space<vmem>>, vector<1x32xf32>
    %65 = vector.broadcast %64 : vector<1x32xf32> to vector<4x32xf32>
    %66 = arith.addf %63, %65 : vector<4x32xf32>
    %cst_50 = arith.constant 0.000000e+00 : f32
    %67 = vector.broadcast %cst_50 : f32 to vector<4x32xf32>
    %68 = arith.maximumf %66, %67 : vector<4x32xf32>
    %69 = vector.broadcast %cst_50 : f32 to vector<4x32xf32>
    %70 = arith.subf %66, %69 : vector<4x32xf32>
    %71 = arith.cmpf one, %70, %70 : vector<4x32xf32>
    %72 = vector.broadcast %cst_50 : f32 to vector<4x32xf32>
    %73 = arith.addf %66, %72 : vector<4x32xf32>
    %74 = math.absf %70 : vector<4x32xf32>
    %cst_51 = arith.constant 0.000000e+00 : f32
    %75 = vector.broadcast %cst_51 : f32 to vector<4x32xf32>
    %76 = arith.subf %75, %74 : vector<4x32xf32>
    %77 = math.exp %76 : vector<4x32xf32>
    %78 = math.log1p %77 : vector<4x32xf32>
    %79 = arith.addf %68, %78 : vector<4x32xf32>
    %80 = arith.select %71, %73, %79 : vector<4x32xi1>, vector<4x32xf32>
    %cst_52 = arith.constant 1.000000e-03 : f32
    %81 = vector.broadcast %cst_52 : f32 to vector<4x32xf32>
    %82 = arith.addf %80, %81 : vector<4x32xf32>
    %c0_53 = arith.constant 0 : index
    %c0_54 = arith.constant 0 : index
    %83 = vector.load %arg20[%c0_53, %c0_54] : memref<32x8xf32, #tpu.memory_space<vmem>>, vector<32x8xf32>
    %cst_55 = arith.constant dense<0.000000e+00> : vector<4x8xf32>
    %84 = tpu.matmul %36, %83, %cst_55 {dimension_numbers = #tpu.dot_dimension_numbers<[1], [0], [0], [1], [0, 0, 1, 1], [], []>} : vector<4x32xf32>, vector<32x8xf32>, vector<4x8xf32> -> vector<4x8xf32>
    %c0_56 = arith.constant 0 : index
    %c0_57 = arith.constant 0 : index
    %85 = vector.load %arg21[%c0_56, %c0_57] : memref<1x8xf32, #tpu.memory_space<vmem>>, vector<1x8xf32>
    %86 = vector.broadcast %85 : vector<1x8xf32> to vector<4x8xf32>
    %87 = arith.addf %84, %86 : vector<4x8xf32>
    %c0_58 = arith.constant 0 : index
    %c0_59 = arith.constant 0 : index
    %88 = vector.load %arg22[%c0_58, %c0_59] : memref<4x128xf32, #tpu.memory_space<vmem>>, vector<4x128xf32>
    tpu.vector_store %arg22[%c0_58, %c0_59], %48 {strides = array<i32>} : memref<4x128xf32, #tpu.memory_space<vmem>>, vector<4x128xf32>,
    %c0_60 = arith.constant 0 : index
    %c0_61 = arith.constant 0 : index
    %89 = vector.load %arg23[%c0_60, %c0_61] : memref<4x32xf32, #tpu.memory_space<vmem>>, vector<4x32xf32>
    tpu.vector_store %arg23[%c0_60, %c0_61], %12 {strides = array<i32>} : memref<4x32xf32, #tpu.memory_space<vmem>>, vector<4x32xf32>,
    %c0_62 = arith.constant 0 : index
    %c0_63 = arith.constant 0 : index
    %90 = vector.load %arg24[%c0_62, %c0_63] : memref<4x32xf32, #tpu.memory_space<vmem>>, vector<4x32xf32>
    tpu.vector_store %arg24[%c0_62, %c0_63], %33 {strides = array<i32>} : memref<4x32xf32, #tpu.memory_space<vmem>>, vector<4x32xf32>,
    %c0_64 = arith.constant 0 : index
    %c0_65 = arith.constant 0 : index
    %91 = vector.load %arg25[%c0_64, %c0_65] : memref<4x32xf32, #tpu.memory_space<vmem>>, vector<4x32xf32>
    tpu.vector_store %arg25[%c0_64, %c0_65], %36 {strides = array<i32>} : memref<4x32xf32, #tpu.memory_space<vmem>>, vector<4x32xf32>,
    %c0_66 = arith.constant 0 : index
    %c0_67 = arith.constant 0 : index
    %92 = vector.load %arg26[%c0_66, %c0_67] : memref<4x32xf32, #tpu.memory_space<vmem>>, vector<4x32xf32>
    tpu.vector_store %arg26[%c0_66, %c0_67], %61 {strides = array<i32>} : memref<4x32xf32, #tpu.memory_space<vmem>>, vector<4x32xf32>,
    %c0_68 = arith.constant 0 : index
    %c0_69 = arith.constant 0 : index
    %93 = vector.load %arg27[%c0_68, %c0_69] : memref<4x32xf32, #tpu.memory_space<vmem>>, vector<4x32xf32>
    tpu.vector_store %arg27[%c0_68, %c0_69], %82 {strides = array<i32>} : memref<4x32xf32, #tpu.memory_space<vmem>>, vector<4x32xf32>,
    %c0_70 = arith.constant 0 : index
    %c0_71 = arith.constant 0 : index
    %94 = vector.load %arg28[%c0_70, %c0_71] : memref<4x8xf32, #tpu.memory_space<vmem>>, vector<4x8xf32>
    tpu.vector_store %arg28[%c0_70, %c0_71], %87 {strides = array<i32>} : memref<4x8xf32, #tpu.memory_space<vmem>>, vector<4x8xf32>,
    return
  }
  func.func @transform_0(%arg0: i32) -> (i32, i32) {
    %c0_i32 = arith.constant 0 : i32
    %c0_i32_0 = arith.constant 0 : i32
    %c0_i32_1 = arith.constant 0 : i32
    return %c0_i32, %c0_i32_0 : i32, i32
  }
  func.func @transform_1(%arg0: i32) -> (i32, i32) {
    %c0_i32 = arith.constant 0 : i32
    %c0_i32_0 = arith.constant 0 : i32
    %c0_i32_1 = arith.constant 0 : i32
    return %c0_i32, %c0_i32_0 : i32, i32
  }
  func.func @transform_2(%arg0: i32) -> (i32, i32) {
    %c0_i32 = arith.constant 0 : i32
    %c0_i32_0 = arith.constant 0 : i32
    %c0_i32_1 = arith.constant 0 : i32
    return %c0_i32, %c0_i32_0 : i32, i32
  }
  func.func @transform_3(%arg0: i32) -> (i32, i32) {
    %c0_i32 = arith.constant 0 : i32
    %c0_i32_0 = arith.constant 0 : i32
    %c0_i32_1 = arith.constant 0 : i32
    return %c0_i32, %c0_i32_0 : i32, i32
  }
  func.func @transform_4(%arg0: i32) -> (i32, i32) {
    %c0_i32 = arith.constant 0 : i32
    %c0_i32_0 = arith.constant 0 : i32
    %c0_i32_1 = arith.constant 0 : i32
    return %c0_i32, %c0_i32_0 : i32, i32
  }
  func.func @transform_5(%arg0: i32) -> (i32, i32) {
    %c0_i32 = arith.constant 0 : i32
    %c0_i32_0 = arith.constant 0 : i32
    %c0_i32_1 = arith.constant 0 : i32
    return %c0_i32, %c0_i32_0 : i32, i32
  }
  func.func @transform_6(%arg0: i32) -> (i32, i32) {
    %c0_i32 = arith.constant 0 : i32
    %c0_i32_0 = arith.constant 0 : i32
    %c0_i32_1 = arith.constant 0 : i32
    return %c0_i32, %c0_i32_0 : i32, i32
  }
  func.func @transform_7(%arg0: i32) -> (i32, i32) {
    %c0_i32 = arith.constant 0 : i32
    %c0_i32_0 = arith.constant 0 : i32
    %c0_i32_1 = arith.constant 0 : i32
    return %c0_i32, %c0_i32_0 : i32, i32
  }
  func.func @transform_8(%arg0: i32) -> (i32, i32) {
    %c0_i32 = arith.constant 0 : i32
    %c0_i32_0 = arith.constant 0 : i32
    %c0_i32_1 = arith.constant 0 : i32
    return %c0_i32, %c0_i32_0 : i32, i32
  }
  func.func @transform_9(%arg0: i32) -> (i32, i32) {
    %c0_i32 = arith.constant 0 : i32
    %c0_i32_0 = arith.constant 0 : i32
    %c0_i32_1 = arith.constant 0 : i32
    return %c0_i32, %c0_i32_0 : i32, i32
  }
  func.func @transform_10(%arg0: i32) -> (i32, i32) {
    %c0_i32 = arith.constant 0 : i32
    %c0_i32_0 = arith.constant 0 : i32
    %c0_i32_1 = arith.constant 0 : i32
    return %c0_i32, %c0_i32_0 : i32, i32
  }
  func.func @transform_11(%arg0: i32) -> (i32, i32) {
    %c0_i32 = arith.constant 0 : i32
    %c0_i32_0 = arith.constant 0 : i32
    %c0_i32_1 = arith.constant 0 : i32
    return %c0_i32, %c0_i32_0 : i32, i32
  }
  func.func @transform_12(%arg0: i32) -> (i32, i32) {
    %c0_i32 = arith.constant 0 : i32
    %c0_i32_0 = arith.constant 0 : i32
    %c0_i32_1 = arith.constant 0 : i32
    return %c0_i32, %c0_i32_0 : i32, i32
  }
  func.func @transform_13(%arg0: i32) -> (i32, i32) {
    %c0_i32 = arith.constant 0 : i32
    %c0_i32_0 = arith.constant 0 : i32
    %c0_i32_1 = arith.constant 0 : i32
    return %c0_i32, %c0_i32_0 : i32, i32
  }
  func.func @transform_14(%arg0: i32) -> (i32, i32) {
    %c0_i32 = arith.constant 0 : i32
    %c0_i32_0 = arith.constant 0 : i32
    %c0_i32_1 = arith.constant 0 : i32
    return %c0_i32, %c0_i32_0 : i32, i32
  }
  func.func @transform_15(%arg0: i32) -> (i32, i32) {
    %c0_i32 = arith.constant 0 : i32
    %c0_i32_0 = arith.constant 0 : i32
    %c0_i32_1 = arith.constant 0 : i32
    return %c0_i32, %c0_i32_0 : i32, i32
  }
  func.func @transform_16(%arg0: i32) -> (i32, i32) {
    %c0_i32 = arith.constant 0 : i32
    %c0_i32_0 = arith.constant 0 : i32
    %c0_i32_1 = arith.constant 0 : i32
    return %c0_i32, %c0_i32_0 : i32, i32
  }
  func.func @transform_17(%arg0: i32) -> (i32, i32) {
    %c0_i32 = arith.constant 0 : i32
    %c0_i32_0 = arith.constant 0 : i32
    %c0_i32_1 = arith.constant 0 : i32
    return %c0_i32, %c0_i32_0 : i32, i32
  }
  func.func @transform_18(%arg0: i32) -> (i32, i32) {
    %c0_i32 = arith.constant 0 : i32
    %c0_i32_0 = arith.constant 0 : i32
    %c0_i32_1 = arith.constant 0 : i32
    return %c0_i32, %c0_i32_0 : i32, i32
  }
  func.func @transform_19(%arg0: i32) -> (i32, i32) {
    %c0_i32 = arith.constant 0 : i32
    %c0_i32_0 = arith.constant 0 : i32
    %c0_i32_1 = arith.constant 0 : i32
    return %c0_i32, %c0_i32_0 : i32, i32
  }
  func.func @transform_20(%arg0: i32) -> (i32, i32) {
    %c0_i32 = arith.constant 0 : i32
    %c0_i32_0 = arith.constant 0 : i32
    %c0_i32_1 = arith.constant 0 : i32
    return %c0_i32, %c0_i32_0 : i32, i32
  }
  func.func @transform_21(%arg0: i32) -> (i32, i32) {
    %c0_i32 = arith.constant 0 : i32
    %c0_i32_0 = arith.constant 0 : i32
    %c0_i32_1 = arith.constant 0 : i32
    return %c0_i32, %c0_i32_0 : i32, i32
  }
  func.func @transform_22(%arg0: i32) -> (i32, i32) {
    %c0_i32 = arith.constant 0 : i32
    %c0_i32_0 = arith.constant 0 : i32
    %c0_i32_1 = arith.constant 0 : i32
    return %c0_i32, %c0_i32_0 : i32, i32
  }
  func.func @transform_23(%arg0: i32) -> (i32, i32) {
    %c0_i32 = arith.constant 0 : i32
    %c0_i32_0 = arith.constant 0 : i32
    %c0_i32_1 = arith.constant 0 : i32
    return %c0_i32, %c0_i32_0 : i32, i32
  }
  func.func @transform_24(%arg0: i32) -> (i32, i32) {
    %c0_i32 = arith.constant 0 : i32
    %c0_i32_0 = arith.constant 0 : i32
    %c0_i32_1 = arith.constant 0 : i32
    return %c0_i32, %c0_i32_0 : i32, i32
  }
  func.func @transform_25(%arg0: i32) -> (i32, i32) {
    %c0_i32 = arith.constant 0 : i32
    %c0_i32_0 = arith.constant 0 : i32
    %c0_i32_1 = arith.constant 0 : i32
    return %c0_i32, %c0_i32_0 : i32, i32
  }
  func.func @transform_26(%arg0: i32) -> (i32, i32) {
    %c0_i32 = arith.constant 0 : i32
    %c0_i32_0 = arith.constant 0 : i32
    %c0_i32_1 = arith.constant 0 : i32
    return %c0_i32, %c0_i32_0 : i32, i32
  }
  func.func @transform_27(%arg0: i32) -> (i32, i32) {
    %c0_i32 = arith.constant 0 : i32
    %c0_i32_0 = arith.constant 0 : i32
    %c0_i32_1 = arith.constant 0 : i32
    return %c0_i32, %c0_i32_0 : i32, i32
  }
}

</mosaic_0001>

<llo_original>
// kernel: vae_forward.1
$region0: #{vae_forward.1}
  #allocation0 [shape = 'u32[]', space=smem, size = 0x4, offset = 0x4, fixed_abs, tag = 'smem constant byte address 0x4 - core index']
  #allocation1 [shape = 'u32[144,128]{1,0:T(1,128)}', space=vmem, size = 0x12000, scoped, tag = 'internal scratch']
  %s0 = inlined_call_operand.vmem [shape: f32[4,128], index: 0, kind: input, shape index: {}]
  %s1 = inlined_call_operand.vmem [shape: f32[4,8], index: 1, kind: input, shape index: {}]
  %s2 = inlined_call_operand.vmem [shape: f32[4,32], index: 2, kind: input, shape index: {}]
  %s3 = inlined_call_operand.vmem [shape: f32[128,128], index: 3, kind: input, shape index: {}]
  %s4 = inlined_call_operand.vmem [shape: f32[1,128], index: 4, kind: input, shape index: {}]
  %s5 = inlined_call_operand.vmem [shape: f32[128,32], index: 5, kind: input, shape index: {}]
  %s6 = inlined_call_operand.vmem [shape: f32[1,32], index: 6, kind: input, shape index: {}]
  %s7 = inlined_call_operand.vmem [shape: f32[128,32], index: 7, kind: input, shape index: {}]
  %s8 = inlined_call_operand.vmem [shape: f32[1,32], index: 8, kind: input, shape index: {}]
  %s9 = inlined_call_operand.vmem [shape: f32[32,64], index: 9, kind: input, shape index: {}]
  %s10 = inlined_call_operand.vmem [shape: f32[1,64], index: 10, kind: input, shape index: {}]
  %s11 = inlined_call_operand.vmem [shape: f32[64,128], index: 11, kind: input, shape index: {}]
  %s12 = inlined_call_operand.vmem [shape: f32[1,128], index: 12, kind: input, shape index: {}]
  %s13 = inlined_call_operand.vmem [shape: f32[8,32], index: 13, kind: input, shape index: {}]
  %s14 = inlined_call_operand.vmem [shape: f32[1,32], index: 14, kind: input, shape index: {}]
  %s15 = inlined_call_operand.vmem [shape: f32[32,32], index: 15, kind: input, shape index: {}]
  %s16 = inlined_call_operand.vmem [shape: f32[1,32], index: 16, kind: input, shape index: {}]
  %s17 = inlined_call_operand.vmem [shape: f32[32,32], index: 17, kind: input, shape index: {}]
  %s18 = inlined_call_operand.vmem [shape: f32[1,32], index: 18, kind: input, shape index: {}]
  %s19 = inlined_call_operand.vmem [shape: f32[32,8], index: 19, kind: input, shape index: {}]
  %s20 = inlined_call_operand.vmem [shape: f32[1,8], index: 20, kind: input, shape index: {}]
  %s21 = inlined_call_operand.hbm [shape: f32[4,128], index: 21, kind: output, shape index: {0}]
  %s22 = inlined_call_operand.vmem [shape: f32[4,32], index: 22, kind: output, shape index: {1}]
  %s23 = inlined_call_operand.vmem [shape: f32[4,32], index: 23, kind: output, shape index: {2}]
  %s24 = inlined_call_operand.vmem [shape: f32[4,32], index: 24, kind: output, shape index: {3}]
  %s25 = inlined_call_operand.vmem [shape: f32[4,32], index: 25, kind: output, shape index: {4}]
  %s26 = inlined_call_operand.vmem [shape: f32[4,32], index: 26, kind: output, shape index: {5}]
  %s27 = inlined_call_operand.vmem [shape: f32[4,8], index: 27, kind: output, shape index: {6}]
  %28 = xla_tuple %s21, %s22, %s23, %s24, %s25, %s26, %s27
  %s29 = sld [smem:[#allocation0]]
  $region142: #{vae_forward.1} parent=0
    _
  %s31 = ssub.s32 1, %s29
  %s32 = scalar_select 0, %s31, %s29
  $region1: #{vae_forward.1} parent=0
    #allocation2 [shape = 'u8[2048]{0}', space=vmem, size = 0x800, scoped, tag = 'output window, operand 0, single buffered']
    #allocation3 [shape = 's32[1]{0}', space=sflag, size = 0x4, scoped, tag = 'scoped memory for vae_forward.1']
    %33 = vsyncpa [#allocation3], 0
    // Predicated region
    $region2: #{vae_forward.1} parent=1 // pred_check
      _
    $region3: #{vae_forward.1} parent=1 // pred_check_branch
      %35 = sbr.rel (0) target = $region5
    $region4: #{vae_forward.1} parent=1 // pred_region
      _
    $region5: #{vae_forward.1} parent=1 // pred_fallthru
      _
    // Predicated region
    $region6: #{vae_forward.1} parent=1 // pred_check
      _
    $region7: #{vae_forward.1} parent=1 // pred_check_branch
      %37 = sbr.rel (0) target = $region9
    $region8: #{vae_forward.1} parent=1 // pred_region
      _
    $region9: #{vae_forward.1} parent=1 // pred_fallthru
      _
    // Predicated region
    $region10: #{vae_forward.1} parent=1 // pred_check
      _
    $region11: #{vae_forward.1} parent=1 // pred_check_branch
      %39 = sbr.rel (0) target = $region13
    $region12: #{vae_forward.1} parent=1 // pred_region
      _
    $region13: #{vae_forward.1} parent=1 // pred_fallthru
      _
    // Predicated region
    $region14: #{vae_forward.1} parent=1 // pred_check
      _
    $region15: #{vae_forward.1} parent=1 // pred_check_branch
      %41 = sbr.rel (0) target = $region17
    $region16: #{vae_forward.1} parent=1 // pred_region
      _
    $region17: #{vae_forward.1} parent=1 // pred_fallthru
      _
    // Predicated region
    $region18: #{vae_forward.1} parent=1 // pred_check
      _
    $region19: #{vae_forward.1} parent=1 // pred_check_branch
      %43 = sbr.rel (0) target = $region21
    $region20: #{vae_forward.1} parent=1 // pred_region
      _
    $region21: #{vae_forward.1} parent=1 // pred_fallthru
      _
    // Predicated region
    $region22: #{vae_forward.1} parent=1 // pred_check
      _
    $region23: #{vae_forward.1} parent=1 // pred_check_branch
      %45 = sbr.rel (0) target = $region25
    $region24: #{vae_forward.1} parent=1 // pred_region
      _
    $region25: #{vae_forward.1} parent=1 // pred_fallthru
      _
    // Predicated region
    $region26: #{vae_forward.1} parent=1 // pred_check
      _
    $region27: #{vae_forward.1} parent=1 // pred_check_branch
      %47 = sbr.rel (0) target = $region29
    $region28: #{vae_forward.1} parent=1 // pred_region
      _
    $region29: #{vae_forward.1} parent=1 // pred_fallthru
      _
    // Predicated region
    $region30: #{vae_forward.1} parent=1 // pred_check
      _
    $region31: #{vae_forward.1} parent=1 // pred_check_branch
      %49 = sbr.rel (0) target = $region33
    $region32: #{vae_forward.1} parent=1 // pred_region
      _
    $region33: #{vae_forward.1} parent=1 // pred_fallthru
      _
    // Predicated region
    $region34: #{vae_forward.1} parent=1 // pred_check
      _
    $region35: #{vae_forward.1} parent=1 // pred_check_branch
      %51 = sbr.rel (0) target = $region37
    $region36: #{vae_forward.1} parent=1 // pred_region
      _
    $region37: #{vae_forward.1} parent=1 // pred_fallthru
      _
    // Predicated region
    $region38: #{vae_forward.1} parent=1 // pred_check
      _
    $region39: #{vae_forward.1} parent=1 // pred_check_branch
      %53 = sbr.rel (0) target = $region41
    $region40: #{vae_forward.1} parent=1 // pred_region
      _
    $region41: #{vae_forward.1} parent=1 // pred_fallthru
      _
    // Predicated region
    $region42: #{vae_forward.1} parent=1 // pred_check
      _
    $region43: #{vae_forward.1} parent=1 // pred_check_branch
      %55 = sbr.rel (0) target = $region45
    $region44: #{vae_forward.1} parent=1 // pred_region
      _
    $region45: #{vae_forward.1} parent=1 // pred_fallthru
      _
    // Predicated region
    $region46: #{vae_forward.1} parent=1 // pred_check
      _
    $region47: #{vae_forward.1} parent=1 // pred_check_branch
      %57 = sbr.rel (0) target = $region49
    $region48: #{vae_forward.1} parent=1 // pred_region
      _
    $region49: #{vae_forward.1} parent=1 // pred_fallthru
      _
    // Predicated region
    $region50: #{vae_forward.1} parent=1 // pred_check
      _
    $region51: #{vae_forward.1} parent=1 // pred_check_branch
      %59 = sbr.rel (0) target = $region53
    $region52: #{vae_forward.1} parent=1 // pred_region
      _
    $region53: #{vae_forward.1} parent=1 // pred_fallthru
      _
    // Predicated region
    $region54: #{vae_forward.1} parent=1 // pred_check
      _
    $region55: #{vae_forward.1} parent=1 // pred_check_branch
      %61 = sbr.rel (0) target = $region57
    $region56: #{vae_forward.1} parent=1 // pred_region
      _
    $region57: #{vae_forward.1} parent=1 // pred_fallthru
      _
    // Predicated region
    $region58: #{vae_forward.1} parent=1 // pred_check
      _
    $region59: #{vae_forward.1} parent=1 // pred_check_branch
      %63 = sbr.rel (0) target = $region61
    $region60: #{vae_forward.1} parent=1 // pred_region
      _
    $region61: #{vae_forward.1} parent=1 // pred_fallthru
      _
    // Predicated region
    $region62: #{vae_forward.1} parent=1 // pred_check
      _
    $region63: #{vae_forward.1} parent=1 // pred_check_branch
      %65 = sbr.rel (0) target = $region65
    $region64: #{vae_forward.1} parent=1 // pred_region
      _
    $region65: #{vae_forward.1} parent=1 // pred_fallthru
      _
    // Predicated region
    $region66: #{vae_forward.1} parent=1 // pred_check
      _
    $region67: #{vae_forward.1} parent=1 // pred_check_branch
      %67 = sbr.rel (0) target = $region69
    $region68: #{vae_forward.1} parent=1 // pred_region
      _
    $region69: #{vae_forward.1} parent=1 // pred_fallthru
      _
    // Predicated region
    $region70: #{vae_forward.1} parent=1 // pred_check
      _
    $region71: #{vae_forward.1} parent=1 // pred_check_branch
      %69 = sbr.rel (0) target = $region73
    $region72: #{vae_forward.1} parent=1 // pred_region
      _
    $region73: #{vae_forward.1} parent=1 // pred_fallthru
      _
    // Predicated region
    $region74: #{vae_forward.1} parent=1 // pred_check
      _
    $region75: #{vae_forward.1} parent=1 // pred_check_branch
      %71 = sbr.rel (0) target = $region77
    $region76: #{vae_forward.1} parent=1 // pred_region
      _
    $region77: #{vae_forward.1} parent=1 // pred_fallthru
      _
    // Predicated region
    $region78: #{vae_forward.1} parent=1 // pred_check
      _
    $region79: #{vae_forward.1} parent=1 // pred_check_branch
      %73 = sbr.rel (0) target = $region81
    $region80: #{vae_forward.1} parent=1 // pred_region
      _
    $region81: #{vae_forward.1} parent=1 // pred_fallthru
      _
    // Predicated region
    $region82: #{vae_forward.1} parent=1 // pred_check
      _
    $region83: #{vae_forward.1} parent=1 // pred_check_branch
      %75 = sbr.rel (0) target = $region85
    $region84: #{vae_forward.1} parent=1 // pred_region
      _
    $region85: #{vae_forward.1} parent=1 // pred_fallthru
      _
    %v76 = vld [vmem:[%s0] sm:$0xf]
    %v77 = vld [vmem:[%s3] sm:$0xff]
    %v78 = vld [vmem:[%s3 + $0x8] sm:$0xff]
    %v79 = vld [vmem:[%s3 + $0x10] sm:$0xff]
    %v80 = vld [vmem:[%s3 + $0x18] sm:$0xff]
    %v81 = vld [vmem:[%s3 + $0x20] sm:$0xff]
    %v82 = vld [vmem:[%s3 + $0x28] sm:$0xff]
    %v83 = vld [vmem:[%s3 + $0x30] sm:$0xff]
    %v84 = vld [vmem:[%s3 + $0x38] sm:$0xff]
    %v85 = vld [vmem:[%s3 + $0x40] sm:$0xff]
    %v86 = vld [vmem:[%s3 + $0x48] sm:$0xff]
    %v87 = vld [vmem:[%s3 + $0x50] sm:$0xff]
    %v88 = vld [vmem:[%s3 + $0x58] sm:$0xff]
    %v89 = vld [vmem:[%s3 + $0x60] sm:$0xff]
    %v90 = vld [vmem:[%s3 + $0x68] sm:$0xff]
    %v91 = vld [vmem:[%s3 + $0x70] sm:$0xff]
    %v92 = vld [vmem:[%s3 + $0x78] sm:$0xff]
    %v93 = vld [vmem:[%s4] sm:$0x1]
    %v95 = vlaneseq
    %v96 = vshrl.u32 %v95, 7
    %v97 = vsub.s32 0, %v96
    %v98 = vrot.slane %v93, %v97
    %100 = vmatprep.subr.mxu0 0.0
    %101 = vmatpush1.msra.mxu0 %v77
    %102 = vmatprep.subr.mxu0 0.0
    %103 = vmatpush1.msra.mxu0 %v78
    %104 = vmatprep.subr.mxu0 0.0
    %105 = vmatpush1.msra.mxu0 %v79
    %106 = vmatprep.subr.mxu0 0.0
    %107 = vmatpush1.msra.mxu0 %v80
    %108 = vmatprep.subr.mxu0 0.0
    %109 = vmatpush1.msra.mxu0 %v81
    %110 = vmatprep.subr.mxu0 0.0
    %111 = vmatpush1.msra.mxu0 %v82
    %112 = vmatprep.subr.mxu0 0.0
    %113 = vmatpush1.msra.mxu0 %v83
    %114 = vmatprep.subr.mxu0 0.0
    %115 = vmatpush1.msra.mxu0 %v84
    %116 = vmatprep.subr.mxu0 0.0
    %117 = vmatpush1.msra.mxu0 %v85
    %118 = vmatprep.subr.mxu0 0.0
    %119 = vmatpush1.msra.mxu0 %v86
    %120 = vmatprep.subr.mxu0 0.0
    %121 = vmatpush1.msra.mxu0 %v87
    %122 = vmatprep.subr.mxu0 0.0
    %123 = vmatpush1.msra.mxu0 %v88
    %124 = vmatprep.subr.mxu0 0.0
    %125 = vmatpush1.msra.mxu0 %v89
    %126 = vmatprep.subr.mxu0 0.0
    %127 = vmatpush1.msra.mxu0 %v90
    %128 = vmatprep.subr.mxu0 0.0
    %129 = vmatpush1.msra.mxu0 %v91
    %130 = vmatprep.subr.mxu0 0.0
    %131 = vmatpush1.msra.mxu0 %v92
    %132 = vmatprep.subr.mxu0 0.0
    %133 = vmatpush1.msra.mxu0 0.0
    %134 = vmatprep.subr.mxu0 0.0
    %135 = vmatpush1.msra.mxu0 0.0
    %136 = vmatprep.subr.mxu0 0.0
    %137 = vmatpush1.msra.mxu0 0.0
    %138 = vmatprep.subr.mxu0 0.0
    %139 = vmatpush1.msra.mxu0 0.0
    %140 = vmatprep.subr.mxu0 0.0
    %141 = vmatpush1.msra.mxu0 0.0
    %142 = vmatprep.subr.mxu0 0.0
    %143 = vmatpush1.msra.mxu0 0.0
    %144 = vmatprep.subr.mxu0 0.0
    %145 = vmatpush1.msra.mxu0 0.0
    %146 = vmatprep.subr.mxu0 0.0
    %147 = vmatpush1.msra.mxu0 0.0
    %148 = vmatprep.subr.mxu0 0.0
    %149 = vmatpush1.msra.mxu0 0.0
    %150 = vmatprep.subr.mxu0 0.0
    %151 = vmatpush1.msra.mxu0 0.0
    %152 = vmatprep.subr.mxu0 0.0
    %153 = vmatpush1.msra.mxu0 0.0
    %154 = vmatprep.subr.mxu0 0.0
    %155 = vmatpush1.msra.mxu0 0.0
    %156 = vmatprep.subr.mxu0 0.0
    %157 = vmatpush1.msra.mxu0 0.0
    %158 = vmatprep.subr.mxu0 0.0
    %159 = vmatpush1.msra.mxu0 0.0
    %160 = vmatprep.subr.mxu0 0.0
    %161 = vmatpush1.msra.mxu0 0.0
    %162 = vmatprep.subr.mxu0 0.0
    %163 = vmatpush1.msra.mxu0 0.0
    %164 = vmatprep.mubr.f32.mxu0 0.0
    %165 = vmatmul.mubr.f32.gmra.mrb[0].mxu0 %v76
    %v166 = vpop.f32.mrb[0].mxu0
    %v167 = vadd.f32 %v98, %v166
    %v168 = vpop.f32.mrb[0].mxu0
    %169 = vdwg.mxu0
    %v170 = vmax.f32 %v167, 0.0
    %v171 = vld [vmem:[%s5] sm:$0xff]
    %v172 = vld [vmem:[%s5 + $0x8] sm:$0xff]
    %v173 = vld [vmem:[%s5 + $0x10] sm:$0xff]
    %v174 = vld [vmem:[%s5 + $0x18] sm:$0xff]
    %v175 = vld [vmem:[%s5 + $0x20] sm:$0xff]
    %v176 = vld [vmem:[%s5 + $0x28] sm:$0xff]
    %v177 = vld [vmem:[%s5 + $0x30] sm:$0xff]
    %v178 = vld [vmem:[%s5 + $0x38] sm:$0xff]
    %v179 = vld [vmem:[%s5 + $0x40] sm:$0xff]
    %v180 = vld [vmem:[%s5 + $0x48] sm:$0xff]
    %v181 = vld [vmem:[%s5 + $0x50] sm:$0xff]
    %v182 = vld [vmem:[%s5 + $0x58] sm:$0xff]
    %v183 = vld [vmem:[%s5 + $0x60] sm:$0xff]
    %v184 = vld [vmem:[%s5 + $0x68] sm:$0xff]
    %v185 = vld [vmem:[%s5 + $0x70] sm:$0xff]
    %v186 = vld [vmem:[%s5 + $0x78] sm:$0xff]
    %v187 = vld [vmem:[%s6] sm:$0x1]
    %v189 = vlaneseq
    %v190 = vshrl.u32 %v189, 7
    %v191 = vsub.s32 0, %v190
    %v192 = vrot.slane %v187, %v191
    %194 = vmatprep.subr.mxu0 0.0
    %195 = vmatpush1.msra.mxu0 %v171
    %196 = vmatprep.subr.mxu0 0.0
    %197 = vmatpush1.msra.mxu0 %v172
    %198 = vmatprep.subr.mxu0 0.0
    %199 = vmatpush1.msra.mxu0 %v173
    %200 = vmatprep.subr.mxu0 0.0
    %201 = vmatpush1.msra.mxu0 %v174
    %202 = vmatprep.subr.mxu0 0.0
    %203 = vmatpush1.msra.mxu0 %v175
    %204 = vmatprep.subr.mxu0 0.0
    %205 = vmatpush1.msra.mxu0 %v176
    %206 = vmatprep.subr.mxu0 0.0
    %207 = vmatpush1.msra.mxu0 %v177
    %208 = vmatprep.subr.mxu0 0.0
    %209 = vmatpush1.msra.mxu0 %v178
    %210 = vmatprep.subr.mxu0 0.0
    %211 = vmatpush1.msra.mxu0 %v179
    %212 = vmatprep.subr.mxu0 0.0
    %213 = vmatpush1.msra.mxu0 %v180
    %214 = vmatprep.subr.mxu0 0.0
    %215 = vmatpush1.msra.mxu0 %v181
    %216 = vmatprep.subr.mxu0 0.0
    %217 = vmatpush1.msra.mxu0 %v182
    %218 = vmatprep.subr.mxu0 0.0
    %219 = vmatpush1.msra.mxu0 %v183
    %220 = vmatprep.subr.mxu0 0.0
    %221 = vmatpush1.msra.mxu0 %v184
    %222 = vmatprep.subr.mxu0 0.0
    %223 = vmatpush1.msra.mxu0 %v185
    %224 = vmatprep.subr.mxu0 0.0
    %225 = vmatpush1.msra.mxu0 %v186
    %226 = vmatprep.subr.mxu0 0.0
    %227 = vmatpush1.msra.mxu0 0.0
    %228 = vmatprep.subr.mxu0 0.0
    %229 = vmatpush1.msra.mxu0 0.0
    %230 = vmatprep.subr.mxu0 0.0
    %231 = vmatpush1.msra.mxu0 0.0
    %232 = vmatprep.subr.mxu0 0.0
    %233 = vmatpush1.msra.mxu0 0.0
    %234 = vmatprep.subr.mxu0 0.0
    %235 = vmatpush1.msra.mxu0 0.0
    %236 = vmatprep.subr.mxu0 0.0
    %237 = vmatpush1.msra.mxu0 0.0
    %238 = vmatprep.subr.mxu0 0.0
    %239 = vmatpush1.msra.mxu0 0.0
    %240 = vmatprep.subr.mxu0 0.0
    %241 = vmatpush1.msra.mxu0 0.0
    %242 = vmatprep.subr.mxu0 0.0
    %243 = vmatpush1.msra.mxu0 0.0
    %244 = vmatprep.subr.mxu0 0.0
    %245 = vmatpush1.msra.mxu0 0.0
    %246 = vmatprep.subr.mxu0 0.0
    %247 = vmatpush1.msra.mxu0 0.0
    %248 = vmatprep.subr.mxu0 0.0
    %249 = vmatpush1.msra.mxu0 0.0
    %250 = vmatprep.subr.mxu0 0.0
    %251 = vmatpush1.msra.mxu0 0.0
    %252 = vmatprep.subr.mxu0 0.0
    %253 = vmatpush1.msra.mxu0 0.0
    %254 = vmatprep.subr.mxu0 0.0
    %255 = vmatpush1.msra.mxu0 0.0
    %256 = vmatprep.subr.mxu0 0.0
    %257 = vmatpush1.msra.mxu0 0.0
    %258 = vmatprep.mubr.f32.mxu0 0.0
    %259 = vmatmul.mubr.f32.gmra.mrb[0].mxu0 %v170
    %v260 = vpop.f32.mrb[0].mxu0
    %v261 = vadd.f32 %v192, %v260
    %v262 = vpop.f32.mrb[0].mxu0
    %263 = vdwg.mxu0
    %v264 = vld [vmem:[%s7] sm:$0xff]
    %v265 = vld [vmem:[%s7 + $0x8] sm:$0xff]
    %v266 = vld [vmem:[%s7 + $0x10] sm:$0xff]
    %v267 = vld [vmem:[%s7 + $0x18] sm:$0xff]
    %v268 = vld [vmem:[%s7 + $0x20] sm:$0xff]
    %v269 = vld [vmem:[%s7 + $0x28] sm:$0xff]
    %v270 = vld [vmem:[%s7 + $0x30] sm:$0xff]
    %v271 = vld [vmem:[%s7 + $0x38] sm:$0xff]
    %v272 = vld [vmem:[%s7 + $0x40] sm:$0xff]
    %v273 = vld [vmem:[%s7 + $0x48] sm:$0xff]
    %v274 = vld [vmem:[%s7 + $0x50] sm:$0xff]
    %v275 = vld [vmem:[%s7 + $0x58] sm:$0xff]
    %v276 = vld [vmem:[%s7 + $0x60] sm:$0xff]
    %v277 = vld [vmem:[%s7 + $0x68] sm:$0xff]
    %v278 = vld [vmem:[%s7 + $0x70] sm:$0xff]
    %v279 = vld [vmem:[%s7 + $0x78] sm:$0xff]
    %v280 = vld [vmem:[%s8] sm:$0x1]
    %v282 = vlaneseq
    %v283 = vshrl.u32 %v282, 7
    %v284 = vsub.s32 0, %v283
    %v285 = vrot.slane %v280, %v284
    %287 = vmatprep.subr.mxu0 0.0
    %288 = vmatpush1.msra.mxu0 %v264
    %289 = vmatprep.subr.mxu0 0.0
    %290 = vmatpush1.msra.mxu0 %v265
    %291 = vmatprep.subr.mxu0 0.0
    %292 = vmatpush1.msra.mxu0 %v266
    %293 = vmatprep.subr.mxu0 0.0
    %294 = vmatpush1.msra.mxu0 %v267
    %295 = vmatprep.subr.mxu0 0.0
    %296 = vmatpush1.msra.mxu0 %v268
    %297 = vmatprep.subr.mxu0 0.0
    %298 = vmatpush1.msra.mxu0 %v269
    %299 = vmatprep.subr.mxu0 0.0
    %300 = vmatpush1.msra.mxu0 %v270
    %301 = vmatprep.subr.mxu0 0.0
    %302 = vmatpush1.msra.mxu0 %v271
    %303 = vmatprep.subr.mxu0 0.0
    %304 = vmatpush1.msra.mxu0 %v272
    %305 = vmatprep.subr.mxu0 0.0
    %306 = vmatpush1.msra.mxu0 %v273
    %307 = vmatprep.subr.mxu0 0.0
    %308 = vmatpush1.msra.mxu0 %v274
    %309 = vmatprep.subr.mxu0 0.0
    %310 = vmatpush1.msra.mxu0 %v275
    %311 = vmatprep.subr.mxu0 0.0
    %312 = vmatpush1.msra.mxu0 %v276
    %313 = vmatprep.subr.mxu0 0.0
    %314 = vmatpush1.msra.mxu0 %v277
    %315 = vmatprep.subr.mxu0 0.0
    %316 = vmatpush1.msra.mxu0 %v278
    %317 = vmatprep.subr.mxu0 0.0
    %318 = vmatpush1.msra.mxu0 %v279
    %319 = vmatprep.subr.mxu0 0.0
    %320 = vmatpush1.msra.mxu0 0.0
    %321 = vmatprep.subr.mxu0 0.0
    %322 = vmatpush1.msra.mxu0 0.0
    %323 = vmatprep.subr.mxu0 0.0
    %324 = vmatpush1.msra.mxu0 0.0
    %325 = vmatprep.subr.mxu0 0.0
    %326 = vmatpush1.msra.mxu0 0.0
    %327 = vmatprep.subr.mxu0 0.0
    %328 = vmatpush1.msra.mxu0 0.0
    %329 = vmatprep.subr.mxu0 0.0
    %330 = vmatpush1.msra.mxu0 0.0
    %331 = vmatprep.subr.mxu0 0.0
    %332 = vmatpush1.msra.mxu0 0.0
    %333 = vmatprep.subr.mxu0 0.0
    %334 = vmatpush1.msra.mxu0 0.0
    %335 = vmatprep.subr.mxu0 0.0
    %336 = vmatpush1.msra.mxu0 0.0
    %337 = vmatprep.subr.mxu0 0.0
    %338 = vmatpush1.msra.mxu0 0.0
    %339 = vmatprep.subr.mxu0 0.0
    %340 = vmatpush1.msra.mxu0 0.0
    %341 = vmatprep.subr.mxu0 0.0
    %342 = vmatpush1.msra.mxu0 0.0
    %343 = vmatprep.subr.mxu0 0.0
    %344 = vmatpush1.msra.mxu0 0.0
    %345 = vmatprep.subr.mxu0 0.0
    %346 = vmatpush1.msra.mxu0 0.0
    %347 = vmatprep.subr.mxu0 0.0
    %348 = vmatpush1.msra.mxu0 0.0
    %349 = vmatprep.subr.mxu0 0.0
    %350 = vmatpush1.msra.mxu0 0.0
    %351 = vmatprep.mubr.f32.mxu0 0.0
    %352 = vmatmul.mubr.f32.gmra.mrb[0].mxu0 %v170
    %v353 = vpop.f32.mrb[0].mxu0
    %v354 = vadd.f32 %v285, %v353
    %v355 = vpop.f32.mrb[0].mxu0
    %356 = vdwg.mxu0
    %v357 = vmax.f32 %v354, 0.0
    %vm358 = vcmp.ne.f32.partialorder %v354, %v354
    %v359 = vadd.f32 %v354, 0.0
    %v360 = vand.u32 2147483647, %v354
    %v361 = vsub.f32 0.0, %v360
    %v362 = vmul.f32 %v361, 1.442695
    %v363 = vpow.pop %v362
    %v364 = vadd.f32 %v363, 1.0
    %v365 = vlog2.pop %v364
    %v366 = vmul.f32 %v365, 0.6931472
    %v367 = vmul.f32 -0.5, %v363
    %v368 = vadd.f32 %v367, 1.0
    %v369 = vmul.f32 %v368, %v363
    %v370 = vand.u32 2147483647, %v363
    %vm371 = vcmp.lt.f32.partialorder %v370, 0.0004427343
    %v372 = vsel %vm371, %v369, %v366
    %v373 = vadd.f32 %v357, %v372
    %v374 = vsel %vm358, %v359, %v373
    %v375 = vadd.f32 %v374, 0.001
    %v376 = vld [vmem:[%s2] sm:$0xf]
    %v377 = vmul.f32 %v375, %v376
    %v378 = vadd.f32 %v261, %v377
    %v379 = vld [vmem:[%s9] sm:$0xff]
    %v380 = vld [vmem:[%s9 + $0x8] sm:$0xff]
    %v381 = vld [vmem:[%s9 + $0x10] sm:$0xff]
    %v382 = vld [vmem:[%s9 + $0x18] sm:$0xff]
    %v383 = vld [vmem:[%s10] sm:$0x1]
    %v385 = vlaneseq
    %v386 = vshrl.u32 %v385, 7
    %v387 = vsub.s32 0, %v386
    %v388 = vrot.slane %v383, %v387
    %vm390 = vcmask 261120
    %v392 = vsel %vm390, %v378, 0
    %394 = vmatprep.subr.mxu0 0.0
    %395 = vmatpush1.msra.mxu0 %v379
    %396 = vmatprep.subr.mxu0 0.0
    %397 = vmatpush1.msra.mxu0 %v380
    %398 = vmatprep.subr.mxu0 0.0
    %399 = vmatpush1.msra.mxu0 %v381
    %400 = vmatprep.subr.mxu0 0.0
    %401 = vmatpush1.msra.mxu0 %v382
    %402 = vmatprep.subr.mxu0 0.0
    %403 = vmatpush1.msra.mxu0 0.0
    %404 = vmatprep.subr.mxu0 0.0
    %405 = vmatpush1.msra.mxu0 0.0
    %406 = vmatprep.subr.mxu0 0.0
    %407 = vmatpush1.msra.mxu0 0.0
    %408 = vmatprep.subr.mxu0 0.0
    %409 = vmatpush1.msra.mxu0 0.0
    %410 = vmatprep.subr.mxu0 0.0
    %411 = vmatpush1.msra.mxu0 0.0
    %412 = vmatprep.subr.mxu0 0.0
    %413 = vmatpush1.msra.mxu0 0.0
    %414 = vmatprep.subr.mxu0 0.0
    %415 = vmatpush1.msra.mxu0 0.0
    %416 = vmatprep.subr.mxu0 0.0
    %417 = vmatpush1.msra.mxu0 0.0
    %418 = vmatprep.subr.mxu0 0.0
    %419 = vmatpush1.msra.mxu0 0.0
    %420 = vmatprep.subr.mxu0 0.0
    %421 = vmatpush1.msra.mxu0 0.0
    %422 = vmatprep.subr.mxu0 0.0
    %423 = vmatpush1.msra.mxu0 0.0
    %424 = vmatprep.subr.mxu0 0.0
    %425 = vmatpush1.msra.mxu0 0.0
    %426 = vmatprep.subr.mxu0 0.0
    %427 = vmatpush1.msra.mxu0 0.0
    %428 = vmatprep.subr.mxu0 0.0
    %429 = vmatpush1.msra.mxu0 0.0
    %430 = vmatprep.subr.mxu0 0.0
    %431 = vmatpush1.msra.mxu0 0.0
    %432 = vmatprep.subr.mxu0 0.0
    %433 = vmatpush1.msra.mxu0 0.0
    %434 = vmatprep.subr.mxu0 0.0
    %435 = vmatpush1.msra.mxu0 0.0
    %436 = vmatprep.subr.mxu0 0.0
    %437 = vmatpush1.msra.mxu0 0.0
    %438 = vmatprep.subr.mxu0 0.0
    %439 = vmatpush1.msra.mxu0 0.0
    %440 = vmatprep.subr.mxu0 0.0
    %441 = vmatpush1.msra.mxu0 0.0
    %442 = vmatprep.subr.mxu0 0.0
    %443 = vmatpush1.msra.mxu0 0.0
    %444 = vmatprep.subr.mxu0 0.0
    %445 = vmatpush1.msra.mxu0 0.0
    %446 = vmatprep.subr.mxu0 0.0
    %447 = vmatpush1.msra.mxu0 0.0
    %448 = vmatprep.subr.mxu0 0.0
    %449 = vmatpush1.msra.mxu0 0.0
    %450 = vmatprep.subr.mxu0 0.0
    %451 = vmatpush1.msra.mxu0 0.0
    %452 = vmatprep.subr.mxu0 0.0
    %453 = vmatpush1.msra.mxu0 0.0
    %454 = vmatprep.subr.mxu0 0.0
    %455 = vmatpush1.msra.mxu0 0.0
    %456 = vmatprep.subr.mxu0 0.0
    %457 = vmatpush1.msra.mxu0 0.0
    %458 = vmatprep.mubr.f32.mxu0 0.0
    %459 = vmatmul.mubr.f32.gmra.mrb[0].mxu0 %v392
    %v460 = vpop.f32.mrb[0].mxu0
    %v461 = vadd.f32 %v388, %v460
    %v462 = vpop.f32.mrb[0].mxu0
    %463 = vdwg.mxu0
    %v464 = vmax.f32 %v461, 0.0
    %v465 = vld [vmem:[%s11] sm:$0xff]
    %v466 = vld [vmem:[%s11 + $0x8] sm:$0xff]
    %v467 = vld [vmem:[%s11 + $0x10] sm:$0xff]
    %v468 = vld [vmem:[%s11 + $0x18] sm:$0xff]
    %v469 = vld [vmem:[%s11 + $0x20] sm:$0xff]
    %v470 = vld [vmem:[%s11 + $0x28] sm:$0xff]
    %v471 = vld [vmem:[%s11 + $0x30] sm:$0xff]
    %v472 = vld [vmem:[%s11 + $0x38] sm:$0xff]
    %v473 = vld [vmem:[%s12] sm:$0x1]
    %v475 = vlaneseq
    %v476 = vshrl.u32 %v475, 7
    %v477 = vsub.s32 0, %v476
    %v478 = vrot.slane %v473, %v477
    %vm480 = vcmask 523264
    %v482 = vsel %vm480, %v464, 0
    %484 = vmatprep.subr.mxu0 0.0
    %485 = vmatpush1.msra.mxu0 %v465
    %486 = vmatprep.subr.mxu0 0.0
    %487 = vmatpush1.msra.mxu0 %v466
    %488 = vmatprep.subr.mxu0 0.0
    %489 = vmatpush1.msra.mxu0 %v467
    %490 = vmatprep.subr.mxu0 0.0
    %491 = vmatpush1.msra.mxu0 %v468
    %492 = vmatprep.subr.mxu0 0.0
    %493 = vmatpush1.msra.mxu0 %v469
    %494 = vmatprep.subr.mxu0 0.0
    %495 = vmatpush1.msra.mxu0 %v470
    %496 = vmatprep.subr.mxu0 0.0
    %497 = vmatpush1.msra.mxu0 %v471
    %498 = vmatprep.subr.mxu0 0.0
    %499 = vmatpush1.msra.mxu0 %v472
    %500 = vmatprep.subr.mxu0 0.0
    %501 = vmatpush1.msra.mxu0 0.0
    %502 = vmatprep.subr.mxu0 0.0
    %503 = vmatpush1.msra.mxu0 0.0
    %504 = vmatprep.subr.mxu0 0.0
    %505 = vmatpush1.msra.mxu0 0.0
    %506 = vmatprep.subr.mxu0 0.0
    %507 = vmatpush1.msra.mxu0 0.0
    %508 = vmatprep.subr.mxu0 0.0
    %509 = vmatpush1.msra.mxu0 0.0
    %510 = vmatprep.subr.mxu0 0.0
    %511 = vmatpush1.msra.mxu0 0.0
    %512 = vmatprep.subr.mxu0 0.0
    %513 = vmatpush1.msra.mxu0 0.0
    %514 = vmatprep.subr.mxu0 0.0
    %515 = vmatpush1.msra.mxu0 0.0
    %516 = vmatprep.subr.mxu0 0.0
    %517 = vmatpush1.msra.mxu0 0.0
    %518 = vmatprep.subr.mxu0 0.0
    %519 = vmatpush1.msra.mxu0 0.0
    %520 = vmatprep.subr.mxu0 0.0
    %521 = vmatpush1.msra.mxu0 0.0
    %522 = vmatprep.subr.mxu0 0.0
    %523 = vmatpush1.msra.mxu0 0.0
    %524 = vmatprep.subr.mxu0 0.0
    %525 = vmatpush1.msra.mxu0 0.0
    %526 = vmatprep.subr.mxu0 0.0
    %527 = vmatpush1.msra.mxu0 0.0
    %528 = vmatprep.subr.mxu0 0.0
    %529 = vmatpush1.msra.mxu0 0.0
    %530 = vmatprep.subr.mxu0 0.0
    %531 = vmatpush1.msra.mxu0 0.0
    %532 = vmatprep.subr.mxu0 0.0
    %533 = vmatpush1.msra.mxu0 0.0
    %534 = vmatprep.subr.mxu0 0.0
    %535 = vmatpush1.msra.mxu0 0.0
    %536 = vmatprep.subr.mxu0 0.0
    %537 = vmatpush1.msra.mxu0 0.0
    %538 = vmatprep.subr.mxu0 0.0
    %539 = vmatpush1.msra.mxu0 0.0
    %540 = vmatprep.subr.mxu0 0.0
    %541 = vmatpush1.msra.mxu0 0.0
    %542 = vmatprep.subr.mxu0 0.0
    %543 = vmatpush1.msra.mxu0 0.0
    %544 = vmatprep.subr.mxu0 0.0
    %545 = vmatpush1.msra.mxu0 0.0
    %546 = vmatprep.subr.mxu0 0.0
    %547 = vmatpush1.msra.mxu0 0.0
    %548 = vmatprep.mubr.f32.mxu0 0.0
    %549 = vmatmul.mubr.f32.gmra.mrb[0].mxu0 %v482
    %v550 = vpop.f32.mrb[0].mxu0
    %v551 = vadd.f32 %v478, %v550
    %v552 = vpop.f32.mrb[0].mxu0
    %553 = vdwg.mxu0
    %v554 = vld [vmem:[%s1] sm:$0xf]
    %v555 = vld [vmem:[%s13] sm:$0xff]
    %v556 = vld [vmem:[%s14] sm:$0x1]
    %v558 = vlaneseq
    %v559 = vshrl.u32 %v558, 7
    %v560 = vsub.s32 0, %v559
    %v561 = vrot.slane %v556, %v560
    %vm563 = vcmask 64512
    %v565 = vsel %vm563, %v554, 0
    %567 = vmatprep.subr.mxu0 0.0
    %568 = vmatpush1.msra.mxu0 %v555
    %569 = vmatprep.subr.mxu0 0.0
    %570 = vmatpush1.msra.mxu0 0.0
    %571 = vmatprep.subr.mxu0 0.0
    %572 = vmatpush1.msra.mxu0 0.0
    %573 = vmatprep.subr.mxu0 0.0
    %574 = vmatpush1.msra.mxu0 0.0
    %575 = vmatprep.subr.mxu0 0.0
    %576 = vmatpush1.msra.mxu0 0.0
    %577 = vmatprep.subr.mxu0 0.0
    %578 = vmatpush1.msra.mxu0 0.0
    %579 = vmatprep.subr.mxu0 0.0
    %580 = vmatpush1.msra.mxu0 0.0
    %581 = vmatprep.subr.mxu0 0.0
    %582 = vmatpush1.msra.mxu0 0.0
    %583 = vmatprep.subr.mxu0 0.0
    %584 = vmatpush1.msra.mxu0 0.0
    %585 = vmatprep.subr.mxu0 0.0
    %586 = vmatpush1.msra.mxu0 0.0
    %587 = vmatprep.subr.mxu0 0.0
    %588 = vmatpush1.msra.mxu0 0.0
    %589 = vmatprep.subr.mxu0 0.0
    %590 = vmatpush1.msra.mxu0 0.0
    %591 = vmatprep.subr.mxu0 0.0
    %592 = vmatpush1.msra.mxu0 0.0
    %593 = vmatprep.subr.mxu0 0.0
    %594 = vmatpush1.msra.mxu0 0.0
    %595 = vmatprep.subr.mxu0 0.0
    %596 = vmatpush1.msra.mxu0 0.0
    %597 = vmatprep.subr.mxu0 0.0
    %598 = vmatpush1.msra.mxu0 0.0
    %599 = vmatprep.subr.mxu0 0.0
    %600 = vmatpush1.msra.mxu0 0.0
    %601 = vmatprep.subr.mxu0 0.0
    %602 = vmatpush1.msra.mxu0 0.0
    %603 = vmatprep.subr.mxu0 0.0
    %604 = vmatpush1.msra.mxu0 0.0
    %605 = vmatprep.subr.mxu0 0.0
    %606 = vmatpush1.msra.mxu0 0.0
    %607 = vmatprep.subr.mxu0 0.0
    %608 = vmatpush1.msra.mxu0 0.0
    %609 = vmatprep.subr.mxu0 0.0
    %610 = vmatpush1.msra.mxu0 0.0
    %611 = vmatprep.subr.mxu0 0.0
    %612 = vmatpush1.msra.mxu0 0.0
    %613 = vmatprep.subr.mxu0 0.0
    %614 = vmatpush1.msra.mxu0 0.0
    %615 = vmatprep.subr.mxu0 0.0
    %616 = vmatpush1.msra.mxu0 0.0
    %617 = vmatprep.subr.mxu0 0.0
    %618 = vmatpush1.msra.mxu0 0.0
    %619 = vmatprep.subr.mxu0 0.0
    %620 = vmatpush1.msra.mxu0 0.0
    %621 = vmatprep.subr.mxu0 0.0
    %622 = vmatpush1.msra.mxu0 0.0
    %623 = vmatprep.subr.mxu0 0.0
    %624 = vmatpush1.msra.mxu0 0.0
    %625 = vmatprep.subr.mxu0 0.0
    %626 = vmatpush1.msra.mxu0 0.0
    %627 = vmatprep.subr.mxu0 0.0
    %628 = vmatpush1.msra.mxu0 0.0
    %629 = vmatprep.subr.mxu0 0.0
    %630 = vmatpush1.msra.mxu0 0.0
    %631 = vmatprep.mubr.f32.mxu0 0.0
    %632 = vmatmul.mubr.f32.gmra.mrb[0].mxu0 %v565
    %v633 = vpop.f32.mrb[0].mxu0
    %v634 = vadd.f32 %v561, %v633
    %v635 = vpop.f32.mrb[0].mxu0
    %636 = vdwg.mxu0
    %v637 = vmax.f32 %v634, 0.0
    %v638 = vld [vmem:[%s15] sm:$0xff]
    %v639 = vld [vmem:[%s15 + $0x8] sm:$0xff]
    %v640 = vld [vmem:[%s15 + $0x10] sm:$0xff]
    %v641 = vld [vmem:[%s15 + $0x18] sm:$0xff]
    %v642 = vld [vmem:[%s16] sm:$0x1]
    %v644 = vlaneseq
    %v645 = vshrl.u32 %v644, 7
    %v646 = vsub.s32 0, %v645
    %v647 = vrot.slane %v642, %v646
    %v650 = vsel %vm390, %v637, 0
    %652 = vmatprep.subr.mxu0 0.0
    %653 = vmatpush1.msra.mxu0 %v638
    %654 = vmatprep.subr.mxu0 0.0
    %655 = vmatpush1.msra.mxu0 %v639
    %656 = vmatprep.subr.mxu0 0.0
    %657 = vmatpush1.msra.mxu0 %v640
    %658 = vmatprep.subr.mxu0 0.0
    %659 = vmatpush1.msra.mxu0 %v641
    %660 = vmatprep.subr.mxu0 0.0
    %661 = vmatpush1.msra.mxu0 0.0
    %662 = vmatprep.subr.mxu0 0.0
    %663 = vmatpush1.msra.mxu0 0.0
    %664 = vmatprep.subr.mxu0 0.0
    %665 = vmatpush1.msra.mxu0 0.0
    %666 = vmatprep.subr.mxu0 0.0
    %667 = vmatpush1.msra.mxu0 0.0
    %668 = vmatprep.subr.mxu0 0.0
    %669 = vmatpush1.msra.mxu0 0.0
    %670 = vmatprep.subr.mxu0 0.0
    %671 = vmatpush1.msra.mxu0 0.0
    %672 = vmatprep.subr.mxu0 0.0
    %673 = vmatpush1.msra.mxu0 0.0
    %674 = vmatprep.subr.mxu0 0.0
    %675 = vmatpush1.msra.mxu0 0.0
    %676 = vmatprep.subr.mxu0 0.0
    %677 = vmatpush1.msra.mxu0 0.0
    %678 = vmatprep.subr.mxu0 0.0
    %679 = vmatpush1.msra.mxu0 0.0
    %680 = vmatprep.subr.mxu0 0.0
    %681 = vmatpush1.msra.mxu0 0.0
    %682 = vmatprep.subr.mxu0 0.0
    %683 = vmatpush1.msra.mxu0 0.0
    %684 = vmatprep.subr.mxu0 0.0
    %685 = vmatpush1.msra.mxu0 0.0
    %686 = vmatprep.subr.mxu0 0.0
    %687 = vmatpush1.msra.mxu0 0.0
    %688 = vmatprep.subr.mxu0 0.0
    %689 = vmatpush1.msra.mxu0 0.0
    %690 = vmatprep.subr.mxu0 0.0
    %691 = vmatpush1.msra.mxu0 0.0
    %692 = vmatprep.subr.mxu0 0.0
    %693 = vmatpush1.msra.mxu0 0.0
    %694 = vmatprep.subr.mxu0 0.0
    %695 = vmatpush1.msra.mxu0 0.0
    %696 = vmatprep.subr.mxu0 0.0
    %697 = vmatpush1.msra.mxu0 0.0
    %698 = vmatprep.subr.mxu0 0.0
    %699 = vmatpush1.msra.mxu0 0.0
    %700 = vmatprep.subr.mxu0 0.0
    %701 = vmatpush1.msra.mxu0 0.0
    %702 = vmatprep.subr.mxu0 0.0
    %703 = vmatpush1.msra.mxu0 0.0
    %704 = vmatprep.subr.mxu0 0.0
    %705 = vmatpush1.msra.mxu0 0.0
    %706 = vmatprep.subr.mxu0 0.0
    %707 = vmatpush1.msra.mxu0 0.0
    %708 = vmatprep.subr.mxu0 0.0
    %709 = vmatpush1.msra.mxu0 0.0
    %710 = vmatprep.subr.mxu0 0.0
    %711 = vmatpush1.msra.mxu0 0.0
    %712 = vmatprep.subr.mxu0 0.0
    %713 = vmatpush1.msra.mxu0 0.0
    %714 = vmatprep.subr.mxu0 0.0
    %715 = vmatpush1.msra.mxu0 0.0
    %716 = vmatprep.mubr.f32.mxu0 0.0
    %717 = vmatmul.mubr.f32.gmra.mrb[0].mxu0 %v650
    %v718 = vpop.f32.mrb[0].mxu0
    %v719 = vadd.f32 %v647, %v718
    %v720 = vpop.f32.mrb[0].mxu0
    %721 = vdwg.mxu0
    %v722 = vld [vmem:[%s17] sm:$0xff]
    %v723 = vld [vmem:[%s17 + $0x8] sm:$0xff]
    %v724 = vld [vmem:[%s17 + $0x10] sm:$0xff]
    %v725 = vld [vmem:[%s17 + $0x18] sm:$0xff]
    %v726 = vld [vmem:[%s18] sm:$0x1]
    %v728 = vlaneseq
    %v729 = vshrl.u32 %v728, 7
    %v730 = vsub.s32 0, %v729
    %v731 = vrot.slane %v726, %v730
    %733 = vmatprep.subr.mxu0 0.0
    %734 = vmatpush1.msra.mxu0 %v722
    %735 = vmatprep.subr.mxu0 0.0
    %736 = vmatpush1.msra.mxu0 %v723
    %737 = vmatprep.subr.mxu0 0.0
    %738 = vmatpush1.msra.mxu0 %v724
    %739 = vmatprep.subr.mxu0 0.0
    %740 = vmatpush1.msra.mxu0 %v725
    %741 = vmatprep.subr.mxu0 0.0
    %742 = vmatpush1.msra.mxu0 0.0
    %743 = vmatprep.subr.mxu0 0.0
    %744 = vmatpush1.msra.mxu0 0.0
    %745 = vmatprep.subr.mxu0 0.0
    %746 = vmatpush1.msra.mxu0 0.0
    %747 = vmatprep.subr.mxu0 0.0
    %748 = vmatpush1.msra.mxu0 0.0
    %749 = vmatprep.subr.mxu0 0.0
    %750 = vmatpush1.msra.mxu0 0.0
    %751 = vmatprep.subr.mxu0 0.0
    %752 = vmatpush1.msra.mxu0 0.0
    %753 = vmatprep.subr.mxu0 0.0
    %754 = vmatpush1.msra.mxu0 0.0
    %755 = vmatprep.subr.mxu0 0.0
    %756 = vmatpush1.msra.mxu0 0.0
    %757 = vmatprep.subr.mxu0 0.0
    %758 = vmatpush1.msra.mxu0 0.0
    %759 = vmatprep.subr.mxu0 0.0
    %760 = vmatpush1.msra.mxu0 0.0
    %761 = vmatprep.subr.mxu0 0.0
    %762 = vmatpush1.msra.mxu0 0.0
    %763 = vmatprep.subr.mxu0 0.0
    %764 = vmatpush1.msra.mxu0 0.0
    %765 = vmatprep.subr.mxu0 0.0
    %766 = vmatpush1.msra.mxu0 0.0
    %767 = vmatprep.subr.mxu0 0.0
    %768 = vmatpush1.msra.mxu0 0.0
    %769 = vmatprep.subr.mxu0 0.0
    %770 = vmatpush1.msra.mxu0 0.0
    %771 = vmatprep.subr.mxu0 0.0
    %772 = vmatpush1.msra.mxu0 0.0
    %773 = vmatprep.subr.mxu0 0.0
    %774 = vmatpush1.msra.mxu0 0.0
    %775 = vmatprep.subr.mxu0 0.0
    %776 = vmatpush1.msra.mxu0 0.0
    %777 = vmatprep.subr.mxu0 0.0
    %778 = vmatpush1.msra.mxu0 0.0
    %779 = vmatprep.subr.mxu0 0.0
    %780 = vmatpush1.msra.mxu0 0.0
    %781 = vmatprep.subr.mxu0 0.0
    %782 = vmatpush1.msra.mxu0 0.0
    %783 = vmatprep.subr.mxu0 0.0
    %784 = vmatpush1.msra.mxu0 0.0
    %785 = vmatprep.subr.mxu0 0.0
    %786 = vmatpush1.msra.mxu0 0.0
    %787 = vmatprep.subr.mxu0 0.0
    %788 = vmatpush1.msra.mxu0 0.0
    %789 = vmatprep.subr.mxu0 0.0
    %790 = vmatpush1.msra.mxu0 0.0
    %791 = vmatprep.subr.mxu0 0.0
    %792 = vmatpush1.msra.mxu0 0.0
    %793 = vmatprep.subr.mxu0 0.0
    %794 = vmatpush1.msra.mxu0 0.0
    %795 = vmatprep.subr.mxu0 0.0
    %796 = vmatpush1.msra.mxu0 0.0
    %797 = vmatprep.mubr.f32.mxu0 0.0
    %798 = vmatmul.mubr.f32.gmra.mrb[0].mxu0 %v650
    %v799 = vpop.f32.mrb[0].mxu0
    %v800 = vadd.f32 %v731, %v799
    %v801 = vpop.f32.mrb[0].mxu0
    %802 = vdwg.mxu0
    %v803 = vmax.f32 %v800, 0.0
    %vm804 = vcmp.ne.f32.partialorder %v800, %v800
    %v805 = vadd.f32 %v800, 0.0
    %v806 = vand.u32 2147483647, %v800
    %v807 = vsub.f32 0.0, %v806
    %v808 = vmul.f32 %v807, 1.442695
    %v809 = vpow.pop %v808
    %v810 = vadd.f32 %v809, 1.0
    %v811 = vlog2.pop %v810
    %v812 = vmul.f32 %v811, 0.6931472
    %v813 = vmul.f32 -0.5, %v809
    %v814 = vadd.f32 %v813, 1.0
    %v815 = vmul.f32 %v814, %v809
    %v816 = vand.u32 2147483647, %v809
    %vm817 = vcmp.lt.f32.partialorder %v816, 0.0004427343
    %v818 = vsel %vm817, %v815, %v812
    %v819 = vadd.f32 %v803, %v818
    %v820 = vsel %vm804, %v805, %v819
    %v821 = vadd.f32 %v820, 0.001
    %v822 = vld [vmem:[%s19] sm:$0xff]
    %v823 = vld [vmem:[%s19 + $0x8] sm:$0xff]
    %v824 = vld [vmem:[%s19 + $0x10] sm:$0xff]
    %v825 = vld [vmem:[%s19 + $0x18] sm:$0xff]
    %v826 = vld [vmem:[%s20] sm:$0x1]
    %v828 = vlaneseq
    %v829 = vshrl.u32 %v828, 7
    %v830 = vsub.s32 0, %v829
    %v831 = vrot.slane %v826, %v830
    %833 = vmatprep.subr.mxu0 0.0
    %834 = vmatpush1.msra.mxu0 %v822
    %835 = vmatprep.subr.mxu0 0.0
    %836 = vmatpush1.msra.mxu0 %v823
    %837 = vmatprep.subr.mxu0 0.0
    %838 = vmatpush1.msra.mxu0 %v824
    %839 = vmatprep.subr.mxu0 0.0
    %840 = vmatpush1.msra.mxu0 %v825
    %841 = vmatprep.subr.mxu0 0.0
    %842 = vmatpush1.msra.mxu0 0.0
    %843 = vmatprep.subr.mxu0 0.0
    %844 = vmatpush1.msra.mxu0 0.0
    %845 = vmatprep.subr.mxu0 0.0
    %846 = vmatpush1.msra.mxu0 0.0
    %847 = vmatprep.subr.mxu0 0.0
    %848 = vmatpush1.msra.mxu0 0.0
    %849 = vmatprep.subr.mxu0 0.0
    %850 = vmatpush1.msra.mxu0 0.0
    %851 = vmatprep.subr.mxu0 0.0
    %852 = vmatpush1.msra.mxu0 0.0
    %853 = vmatprep.subr.mxu0 0.0
    %854 = vmatpush1.msra.mxu0 0.0
    %855 = vmatprep.subr.mxu0 0.0
    %856 = vmatpush1.msra.mxu0 0.0
    %857 = vmatprep.subr.mxu0 0.0
    %858 = vmatpush1.msra.mxu0 0.0
    %859 = vmatprep.subr.mxu0 0.0
    %860 = vmatpush1.msra.mxu0 0.0
    %861 = vmatprep.subr.mxu0 0.0
    %862 = vmatpush1.msra.mxu0 0.0
    %863 = vmatprep.subr.mxu0 0.0
    %864 = vmatpush1.msra.mxu0 0.0
    %865 = vmatprep.subr.mxu0 0.0
    %866 = vmatpush1.msra.mxu0 0.0
    %867 = vmatprep.subr.mxu0 0.0
    %868 = vmatpush1.msra.mxu0 0.0
    %869 = vmatprep.subr.mxu0 0.0
    %870 = vmatpush1.msra.mxu0 0.0
    %871 = vmatprep.subr.mxu0 0.0
    %872 = vmatpush1.msra.mxu0 0.0
    %873 = vmatprep.subr.mxu0 0.0
    %874 = vmatpush1.msra.mxu0 0.0
    %875 = vmatprep.subr.mxu0 0.0
    %876 = vmatpush1.msra.mxu0 0.0
    %877 = vmatprep.subr.mxu0 0.0
    %878 = vmatpush1.msra.mxu0 0.0
    %879 = vmatprep.subr.mxu0 0.0
    %880 = vmatpush1.msra.mxu0 0.0
    %881 = vmatprep.subr.mxu0 0.0
    %882 = vmatpush1.msra.mxu0 0.0
    %883 = vmatprep.subr.mxu0 0.0
    %884 = vmatpush1.msra.mxu0 0.0
    %885 = vmatprep.subr.mxu0 0.0
    %886 = vmatpush1.msra.mxu0 0.0
    %887 = vmatprep.subr.mxu0 0.0
    %888 = vmatpush1.msra.mxu0 0.0
    %889 = vmatprep.subr.mxu0 0.0
    %890 = vmatpush1.msra.mxu0 0.0
    %891 = vmatprep.subr.mxu0 0.0
    %892 = vmatpush1.msra.mxu0 0.0
    %893 = vmatprep.subr.mxu0 0.0
    %894 = vmatpush1.msra.mxu0 0.0
    %895 = vmatprep.subr.mxu0 0.0
    %896 = vmatpush1.msra.mxu0 0.0
    %897 = vmatprep.mubr.f32.mxu0 0.0
    %898 = vmatmul.mubr.f32.gmra.mrb[0].mxu0 %v392
    %v899 = vpop.f32.mrb[0].mxu0
    %v900 = vadd.f32 %v831, %v899
    %v901 = vpop.f32.mrb[0].mxu0
    %902 = vdwg.mxu0
    %903 = vst [vmem:[#allocation2] sm:$0xf] %v551
    %vm904 = vcmask 257024
    %905 = vst.msk [vmem:[%s22] sm:$0xf] %vm904, %v261
    %906 = vst.msk [vmem:[%s23] sm:$0xf] %vm904, %v375
    %907 = vst.msk [vmem:[%s24] sm:$0xf] %vm904, %v378
    %908 = vst.msk [vmem:[%s25] sm:$0xf] %vm904, %v719
    %909 = vst.msk [vmem:[%s26] sm:$0xf] %vm904, %v821
    %vm910 = vcmask 60416
    %911 = vst.msk [vmem:[%s27] sm:$0xf] %vm910, %v900
    // Predicated region
    $region86: #{vae_forward.1} parent=1 // pred_check
      _
    $region87: #{vae_forward.1} parent=1 // pred_check_branch
      %913 = sbr.rel (0) target = $region89
    $region88: #{vae_forward.1} parent=1 // pred_region
      %s915 = ssub.s32 64, 64
      %916 = vsyncadd [#allocation3], %s915
      %s918 = sshll.u32 [#allocation2], 4
      %s919 = int_to_ptr.vmem [resolvable:$true] %s918
      %921 = dma.vmem_to_hbm [thread:$0]  %s919, 64, %s21, [#allocation3]
    $region89: #{vae_forward.1} parent=1 // pred_fallthru
      _
    // Predicated region
    $region90: #{vae_forward.1} parent=1 // pred_check
      _
    $region91: #{vae_forward.1} parent=1 // pred_check_branch
      %923 = sbr.rel (0) target = $region93
    $region92: #{vae_forward.1} parent=1 // pred_region
      _
    $region93: #{vae_forward.1} parent=1 // pred_fallthru
      _
    // Predicated region
    $region94: #{vae_forward.1} parent=1 // pred_check
      _
    $region95: #{vae_forward.1} parent=1 // pred_check_branch
      %925 = sbr.rel (0) target = $region97
    $region96: #{vae_forward.1} parent=1 // pred_region
      _
    $region97: #{vae_forward.1} parent=1 // pred_fallthru
      _
    // Predicated region
    $region98: #{vae_forward.1} parent=1 // pred_check
      _
    $region99: #{vae_forward.1} parent=1 // pred_check_branch
      %927 = sbr.rel (0) target = $region101
    $region100: #{vae_forward.1} parent=1 // pred_region
      _
    $region101: #{vae_forward.1} parent=1 // pred_fallthru
      _
    // Predicated region
    $region102: #{vae_forward.1} parent=1 // pred_check
      _
    $region103: #{vae_forward.1} parent=1 // pred_check_branch
      %929 = sbr.rel (0) target = $region105
    $region104: #{vae_forward.1} parent=1 // pred_region
      _
    $region105: #{vae_forward.1} parent=1 // pred_fallthru
      _
    // Predicated region
    $region106: #{vae_forward.1} parent=1 // pred_check
      _
    $region107: #{vae_forward.1} parent=1 // pred_check_branch
      %931 = sbr.rel (0) target = $region109
    $region108: #{vae_forward.1} parent=1 // pred_region
      _
    $region109: #{vae_forward.1} parent=1 // pred_fallthru
      _
    // Predicated region
    $region110: #{vae_forward.1} parent=1 // pred_check
      _
    $region111: #{vae_forward.1} parent=1 // pred_check_branch
      %933 = sbr.rel (0) target = $region113
    $region112: #{vae_forward.1} parent=1 // pred_region
      _
    $region113: #{vae_forward.1} parent=1 // pred_fallthru
      _
    // Predicated region
    $region114: #{vae_forward.1} parent=1 // pred_check
      _
    $region115: #{vae_forward.1} parent=1 // pred_check_branch
      %935 = sbr.rel (0) target = $region117
    $region116: #{vae_forward.1} parent=1 // pred_region
      %936 = dma.done [#allocation3], 64
    $region117: #{vae_forward.1} parent=1 // pred_fallthru
      _
    // Predicated region
    $region118: #{vae_forward.1} parent=1 // pred_check
      _
    $region119: #{vae_forward.1} parent=1 // pred_check_branch
      %938 = sbr.rel (0) target = $region121
    $region120: #{vae_forward.1} parent=1 // pred_region
      _
    $region121: #{vae_forward.1} parent=1 // pred_fallthru
      _
    // Predicated region
    $region122: #{vae_forward.1} parent=1 // pred_check
      _
    $region123: #{vae_forward.1} parent=1 // pred_check_branch
      %940 = sbr.rel (0) target = $region125
    $region124: #{vae_forward.1} parent=1 // pred_region
      _
    $region125: #{vae_forward.1} parent=1 // pred_fallthru
      _
    // Predicated region
    $region126: #{vae_forward.1} parent=1 // pred_check
      _
    $region127: #{vae_forward.1} parent=1 // pred_check_branch
      %942 = sbr.rel (0) target = $region129
    $region128: #{vae_forward.1} parent=1 // pred_region
      _
    $region129: #{vae_forward.1} parent=1 // pred_fallthru
      _
    // Predicated region
    $region130: #{vae_forward.1} parent=1 // pred_check
      _
    $region131: #{vae_forward.1} parent=1 // pred_check_branch
      %944 = sbr.rel (0) target = $region133
    $region132: #{vae_forward.1} parent=1 // pred_region
      _
    $region133: #{vae_forward.1} parent=1 // pred_fallthru
      _
    // Predicated region
    $region134: #{vae_forward.1} parent=1 // pred_check
      _
    $region135: #{vae_forward.1} parent=1 // pred_check_branch
      %946 = sbr.rel (0) target = $region137
    $region136: #{vae_forward.1} parent=1 // pred_region
      _
    $region137: #{vae_forward.1} parent=1 // pred_fallthru
      _
    // Predicated region
    $region138: #{vae_forward.1} parent=1 // pred_check
      _
    $region139: #{vae_forward.1} parent=1 // pred_check_branch
      %948 = sbr.rel (0) target = $region141
    $region140: #{vae_forward.1} parent=1 // pred_region
      _
    $region141: #{vae_forward.1} parent=1 // pred_fallthru
      _
    %949 = vsyncpa [#allocation3], 1

</llo_original>
